<compile_context>
chip_gen: v7x
topology: tpu7x:2x2x1
jax: 0.10.0
libtpu: 0.0.40
codegen_flags: <defaults>
</compile_context>

<pallas_src>
import jax
import jax.numpy as jnp
from jax import lax
from jax.experimental import pallas as pl
from jax.experimental.pallas import tpu as pltpu


def _round_up(v, m):
    return (v + m - 1) // m * m


def _largest_divisor_leq(n, cap):
    for d in range(min(n, cap), 0, -1):
        if n % d == 0:
            return d
    return 1


def bottleneck_kernel(xm_ref, xt_ref, xb_ref, w1_ref, b1_ref, w2_ref, b2_ref,
                      w3_ref, b3_ref, o_ref, pad_ref):
    """Fused conv1x1-BN-ReLU -> conv3x3-BN-ReLU -> conv1x1-BN -> +x -> ReLU.

    Grid: (batch tile, row tile).  BN scales are folded into the conv weights
    on the host; only the folded bias adds remain in-kernel.

    xm_ref : (Nb, Ht, W, Cin)  bf16  rows this tile produces outputs for
    xt_ref : (Nb, 1,  W, Cin)  bf16  row above (clamped; zeroed when r == 0)
    xb_ref : (Nb, 1,  W, Cin)  bf16  row below (clamped; zeroed when r == last)
    w1_ref : (Cin, P)          bf16  conv1 weight, BN1 scale folded in
    w2_ref : (3, 3P, P)        bf16  conv2 weight, BN2 folded; slice dy holds
                                     the (P,P) tap (dy,dx) at rows dx*P:(dx+1)*P
    w3_ref : (P, Cout)         bf16  conv3 weight, BN3 folded
    b*_ref : (1, C)            f32   folded BN biases
    o_ref  : (Nb, Ht, W, Cout) bf16
    pad_ref: (Nb, Ht+2, Wq, 3P) bf16 VMEM scratch, Wq = round_up(W+2, 8).
             Channel block dx holds y1 shifted left by dx, so tap-row dy of the
             3x3 conv is the single contiguous slab pad_ref[:, dy:dy+Ht].
    """
    Nb, Ht, W, Cin = xm_ref.shape
    P = w1_ref.shape[1]
    Cout = w3_ref.shape[1]
    Wq = pad_ref.shape[2]
    Rp = Ht + 2
    C3 = 3 * P

    r = pl.program_id(1)
    n_r = pl.num_programs(1)

    # --- conv1x1 (+BN1 bias) + ReLU over Ht + 2 rows (1-row halo) -----------
    x_full = jnp.concatenate([xt_ref[...], xm_ref[...], xb_ref[...]], axis=1)
    y1 = jnp.dot(x_full.reshape(Nb * Rp * W, Cin), w1_ref[...],
                 preferred_element_type=jnp.float32)
    y1 = jnp.maximum(y1 + b1_ref[...], 0.0).astype(jnp.bfloat16)
    y1 = y1.reshape(Nb, Rp, W, P)

    # W-direction conv padding: left col of the dx=0 block, right col of dx=2.
    zcol = jnp.zeros((Nb, Rp, 1, P), jnp.bfloat16)
    pad_ref[:, :, 0:1, 0:P] = zcol
    pad_ref[:, :, W - 1:W, 2 * P:3 * P] = zcol
    # Keep the never-read phantom columns [W, Wq) deterministic (cheap).
    pad_ref[:, :, W:Wq, :] = jnp.zeros((Nb, Rp, Wq - W, C3), jnp.bfloat16)

    # Three dx-shifted copies of y1 (already bf16 -> half the store bytes).
    pad_ref[:, :, 1:W + 1, 0:P] = y1                          # dx = 0
    pad_ref[:, :, 0:W, P:2 * P] = y1                          # dx = 1
    pad_ref[:, :, 0:W - 1, 2 * P:3 * P] = y1[:, :, 1:W, :]    # dx = 2

    # H-direction conv padding: the first / last row tile's halo row is image
    # row -1 / H, i.e. zero padding -- overwrite it after the y1 writes.
    @pl.when(r == 0)
    def _():
        pad_ref[:, 0:1, :, :] = jnp.zeros((Nb, 1, Wq, C3), jnp.bfloat16)

    @pl.when(r == n_r - 1)
    def _():
        pad_ref[:, Rp - 1:Rp, :, :] = jnp.zeros((Nb, 1, Wq, C3), jnp.bfloat16)

    # --- conv3x3 (pad=1, stride=1): 3 matmuls with K = 3P --------------------
    acc = jnp.dot(pad_ref[:, 0:Ht, :, :].reshape(Nb * Ht * Wq, C3), w2_ref[0],
                  preferred_element_type=jnp.float32)
    for dy in (1, 2):
        acc = acc + jnp.dot(
            pad_ref[:, dy:dy + Ht, :, :].reshape(Nb * Ht * Wq, C3), w2_ref[dy],
            preferred_element_type=jnp.float32)
    y2 = jnp.maximum(acc + b2_ref[...], 0.0).astype(jnp.bfloat16)
    # Crop the phantom columns once, before the (K=P, N=4P) matmul.
    y2 = y2.reshape(Nb, Ht, Wq, P)[:, :, 0:W, :].reshape(Nb * Ht * W, P)

    # --- conv1x1 (+BN3 bias), residual add, ReLU -----------------------------
    y3 = jnp.dot(y2, w3_ref[...], preferred_element_type=jnp.float32)
    y3 = y3 + b3_ref[...]
    res = xm_ref[...].reshape(Nb * Ht * W, Cin).astype(jnp.float32)
    y3 = jnp.maximum(y3 + res, 0.0)
    o_ref[...] = y3.reshape(Nb, Ht, W, Cout).astype(o_ref.dtype)


def _compiler_params():
    kwargs = dict(dimension_semantics=("parallel", "parallel"))
    # Raise the scoped-VMEM limit, clamped to 3/4 of physical VMEM so it is
    # safe on v7x (64 MiB) as well as v5e/v6e (128 MiB).
    try:
        cap = getattr(pltpu.get_tpu_info(), "vmem_capacity_bytes", None)
        if cap:
            kwargs["vmem_limit_bytes"] = int(min(cap * 3 // 4,
                                                 100 * 1024 * 1024))
    except Exception:
        pass
    return pltpu.CompilerParams(**kwargs)


def bottleneck_forward_nhwc(x, w1, b1, w2m, b2, w3, b3, *,
                            batch_tile=None, row_tile=None):
    """x: (N, H, W, Cin) -> (N, H, W, Cout) bf16.  Fast (no-transpose) path."""
    N, H, W, Cin = x.shape
    P = w1.shape[1]
    Cout = w3.shape[1]
    assert Cin == Cout, "shortcut=None requires in_planes == 4*planes"

    Ht = row_tile if row_tile is not None else _largest_divisor_leq(H, 16)
    assert H % Ht == 0
    if batch_tile is not None:
        Nb = batch_tile
    elif H * W <= 256:                  # 14x14 / 7x7 stages: batch images
        Nb = _largest_divisor_leq(N, 8)
    else:
        Nb = 1
    assert N % Nb == 0
    Wq = _round_up(W + 2, 8)

    x = x.astype(jnp.bfloat16)

    def wspec(a):
        nd = a.ndim
        return pl.BlockSpec(a.shape, lambda b, r, _nd=nd: (0,) * _nd)

    in_specs = [
        # rows this tile writes
        pl.BlockSpec((Nb, Ht, W, Cin), lambda b, r: (b, r, 0, 0)),
        # 1-row halo above / below (clamped; boundary tiles zero it in-kernel)
        pl.BlockSpec((Nb, 1, W, Cin),
                     lambda b, r: (b, jnp.maximum(r * Ht - 1, 0), 0, 0)),
        pl.BlockSpec((Nb, 1, W, Cin),
                     lambda b, r: (b, jnp.minimum(r * Ht + Ht, H - 1), 0, 0)),
        wspec(w1), wspec(b1), wspec(w2m), wspec(b2), wspec(w3), wspec(b3),
    ]

    return pl.pallas_call(
        bottleneck_kernel,
        out_shape=jax.ShapeDtypeStruct((N, H, W, Cout), jnp.bfloat16),
        grid_spec=pltpu.PrefetchScalarGridSpec(
            num_scalar_prefetch=0,
            grid=(N // Nb, H // Ht),
            in_specs=in_specs,
            out_specs=pl.BlockSpec((Nb, Ht, W, Cout),
                                   lambda b, r: (b, r, 0, 0)),
            scratch_shapes=[
                pltpu.VMEM((Nb, Ht + 2, Wq, 3 * P), jnp.bfloat16)],
        ),
        compiler_params=_compiler_params(),
    )(x, x, x, w1, b1, w2m, b2, w3, b3)


@jax.jit
def bottleneck_forward(x_nchw, w1, b1, w2m, b2, w3, b3):
    """PyTorch-compatible NCHW wrapper.  Prefer bottleneck_forward_nhwc to
    avoid the two boundary HBM transposes when the model is NHWC."""
    x = jnp.transpose(x_nchw, (0, 2, 3, 1)).astype(jnp.bfloat16)
    y = bottleneck_forward_nhwc(x, w1, b1, w2m, b2, w3, b3)
    return jnp.transpose(y, (0, 3, 1, 2)).astype(x_nchw.dtype)


# ----------------------------- parameter prep --------------------------------

def make_raw_params(key, in_planes, planes):
    """Synthetic conv weights + BN folded to (scale, bias), all f32."""
    expansion = 4
    ks = jax.random.split(key, 12)
    eps = 1e-5

    def fold_bn(kg, kb, km, kv, c):
        gamma = jax.random.uniform(kg, (c,), jnp.float32, 0.5, 1.5)
        beta = 0.1 * jax.random.normal(kb, (c,), jnp.float32)
        mean = 0.1 * jax.random.normal(km, (c,), jnp.float32)
        var = jax.random.uniform(kv, (c,), jnp.float32, 0.5, 1.5)
        scale = gamma / jnp.sqrt(var + eps)
        bias = beta - mean * scale
        return scale.reshape(1, c), bias.reshape(1, c)

    w1 = 0.1 * jax.random.normal(ks[0], (in_planes, planes), jnp.float32)
    s1, b1 = fold_bn(ks[1], ks[2], ks[3], ks[4], planes)
    w2 = 0.1 * jax.random.normal(ks[5], (3, 3, planes, planes), jnp.float32)
    s2, b2 = fold_bn(ks[6], ks[7], ks[8], ks[9], planes)
    w3 = 0.1 * jax.random.normal(ks[10], (planes, planes * expansion),
                                 jnp.float32)
    s3, b3 = fold_bn(*jax.random.split(ks[11], 4), planes * expansion)
    return w1, s1, b1, w2, s2, b2, w3, s3, b3


def prepare_params(w1, s1, b1, w2, s2, b2, w3, s3, b3):
    """Fold BN scale into conv weights (per output channel), cast to bf16,
    reshape conv2 to (3, 3P, P) tap-row blocks.  Biases stay f32."""
    P = w1.shape[1]
    w1f = (w1 * s1).astype(jnp.bfloat16)                       # (Cin, P)
    w2f = (w2 * s2[0]).astype(jnp.bfloat16)                    # (3, 3, P, P)
    w2m = w2f.reshape(3, 3 * P, P)                             # (3, 3P, P)
    w3f = (w3 * s3).astype(jnp.bfloat16)                       # (P, 4P)
    return w1f, b1, w2m, b2, w3f, b3


# ------------------------------- reference -----------------------------------

def reference_forward_nhwc(x, w1, b1, w2m, b2, w3, b3):
    """Pure-JAX (XLA conv) reference with the same bf16 rounding points."""
    f32 = lambda a: a.astype(jnp.float32)
    P = w1.shape[1]
    dn = ('NHWC', 'HWIO', 'NHWC')

    xb = f32(x.astype(jnp.bfloat16))
    y = lax.conv_general_dilated(xb, f32(w1)[None, None], (1, 1), 'VALID',
                                 dimension_numbers=dn)
    y = jax.nn.relu(y + b1[0])
    y = f32(y.astype(jnp.bfloat16))          # kernel stores y1 in bf16 scratch
    y = lax.conv_general_dilated(y, f32(w2m).reshape(3, 3, P, P), (1, 1),
                                 'SAME', dimension_numbers=dn)
    y = jax.nn.relu(y + b2[0])
    y = f32(y.astype(jnp.bfloat16))          # kernel casts y2 to bf16
    y = lax.conv_general_dilated(y, f32(w3)[None, None], (1, 1), 'VALID',
                                 dimension_numbers=dn)
    y = jax.nn.relu(y + b3[0] + xb)
    return y


if __name__ == "__main__":
    # Bottleneck with shortcut=None needs in_planes == 4*planes and stride == 1
    # for the residual add to be shape-valid.
    key = jax.random.PRNGKey(0)
    configs = [
        # (N, planes, H,  W,  batch_tile, row_tile)
        (2, 8, 16, 16, 1, 8),   # exercises the row-tiled halo path (2 tiles)
        (4, 8, 8, 8, 2, 8),     # exercises the multi-image (Nb=2) path
    ]
    run = jax.jit(bottleneck_forward_nhwc,
                  static_argnames=("batch_tile", "row_tile"))

    for (N, planes, H, W, Nb, Ht) in configs:
        in_planes = planes * 4
        kx, kp, key = jax.random.split(key, 3)
        x = jax.random.normal(kx, (N, H, W, in_planes), jnp.float32)  # NHWC
        params = prepare_params(*make_raw_params(kp, in_planes, planes))

        out = jax.block_until_ready(
            run(x, *params, batch_tile=Nb, row_tile=Ht))
        ref = reference_forward_nhwc(x, *params)

        assert out.shape == (N, H, W, in_planes)
        assert out.dtype == jnp.bfloat16
        out_f = out.astype(jnp.float32)
        max_err = float(jnp.max(jnp.abs(out_f - ref)))
        assert jnp.allclose(out_f, ref, rtol=3e-2, atol=3e-2), max_err

    print("KERNEL_OK")
</pallas_src>

<mosaic_0001>
module attributes {stable_mosaic.version = 11 : i64} {
  func.func @bottleneck_kernel(%arg0: i32, %arg1: i32, %arg2: memref<1x8x16x32xbf16, #tpu.memory_space<vmem>>, %arg3: memref<1x1x16x32xbf16, #tpu.memory_space<vmem>>, %arg4: memref<1x1x16x32xbf16, #tpu.memory_space<vmem>>, %arg5: memref<32x8xbf16, #tpu.memory_space<vmem>>, %arg6: memref<1x8xf32, #tpu.memory_space<vmem>>, %arg7: memref<3x24x8xbf16, #tpu.memory_space<vmem>>, %arg8: memref<1x8xf32, #tpu.memory_space<vmem>>, %arg9: memref<8x32xbf16, #tpu.memory_space<vmem>>, %arg10: memref<1x32xf32, #tpu.memory_space<vmem>>, %arg11: memref<1x8x16x32xbf16, #tpu.memory_space<vmem>>, %arg12: memref<1x10x24x24xbf16, #tpu.memory_space<vmem>>) attributes {dimension_semantics = [#tpu.dimension_semantics<parallel>, #tpu.dimension_semantics<parallel>], iteration_bounds = array<i64: 2, 2>, scalar_prefetch = 0 : i64, scratch_operands = 1 : i64, tpu.core_type = #tpu.core_type<tc>, window_params = [{transform_indices = @transform_0, window_bounds = array<i64: 1, 8, 16, 32>}, {transform_indices = @transform_1, window_bounds = array<i64: 1, 1, 16, 32>}, {transform_indices = @transform_2, window_bounds = array<i64: 1, 1, 16, 32>}, {pipeline_mode = #tpu.pipeline_mode<synchronous>, transform_indices = @transform_3, window_bounds = array<i64: 32, 8>}, {pipeline_mode = #tpu.pipeline_mode<synchronous>, transform_indices = @transform_4, window_bounds = array<i64: 1, 8>}, {pipeline_mode = #tpu.pipeline_mode<synchronous>, transform_indices = @transform_5, window_bounds = array<i64: 3, 24, 8>}, {pipeline_mode = #tpu.pipeline_mode<synchronous>, transform_indices = @transform_6, window_bounds = array<i64: 1, 8>}, {pipeline_mode = #tpu.pipeline_mode<synchronous>, transform_indices = @transform_7, window_bounds = array<i64: 8, 32>}, {pipeline_mode = #tpu.pipeline_mode<synchronous>, transform_indices = @transform_8, window_bounds = array<i64: 1, 32>}, {transform_indices = @transform_9, window_bounds = array<i64: 1, 8, 16, 32>}]} {
    %c0 = arith.constant 0 : index
    %c0_0 = arith.constant 0 : index
    %c0_1 = arith.constant 0 : index
    %c0_2 = arith.constant 0 : index
    %0 = vector.load %arg3[%c0, %c0_0, %c0_1, %c0_2] : memref<1x1x16x32xbf16, #tpu.memory_space<vmem>>, vector<1x1x16x32xbf16>
    %c0_3 = arith.constant 0 : index
    %c0_4 = arith.constant 0 : index
    %c0_5 = arith.constant 0 : index
    %c0_6 = arith.constant 0 : index
    %1 = vector.load %arg2[%c0_3, %c0_4, %c0_5, %c0_6] : memref<1x8x16x32xbf16, #tpu.memory_space<vmem>>, vector<1x8x16x32xbf16>
    %c0_7 = arith.constant 0 : index
    %c0_8 = arith.constant 0 : index
    %c0_9 = arith.constant 0 : index
    %c0_10 = arith.constant 0 : index
    %2 = vector.load %arg4[%c0_7, %c0_8, %c0_9, %c0_10] : memref<1x1x16x32xbf16, #tpu.memory_space<vmem>>, vector<1x1x16x32xbf16>
    %3 = tpu.concatenate %0, %1, %2 in 1 : vector<1x1x16x32xbf16>, vector<1x8x16x32xbf16>, vector<1x1x16x32xbf16> -> vector<1x10x16x32xbf16>
    %4 = vector.shape_cast %3 : vector<1x10x16x32xbf16> to vector<160x32xbf16>
    %c0_11 = arith.constant 0 : index
    %c0_12 = arith.constant 0 : index
    %5 = vector.load %arg5[%c0_11, %c0_12] : memref<32x8xbf16, #tpu.memory_space<vmem>>, vector<32x8xbf16>
    %cst = arith.constant dense<0.000000e+00> : vector<160x8xf32>
    %6 = tpu.matmul %4, %5, %cst {dimension_numbers = #tpu.dot_dimension_numbers<[1], [0], [0], [1], [0, 0, 1, 1], [], []>} : vector<160x32xbf16>, vector<32x8xbf16>, vector<160x8xf32> -> vector<160x8xf32>
    %c0_13 = arith.constant 0 : index
    %c0_14 = arith.constant 0 : index
    %7 = vector.load %arg6[%c0_13, %c0_14] : memref<1x8xf32, #tpu.memory_space<vmem>>, vector<1x8xf32>
    %8 = vector.broadcast %7 : vector<1x8xf32> to vector<160x8xf32>
    %9 = arith.addf %6, %8 : vector<160x8xf32>
    %cst_15 = arith.constant 0.000000e+00 : f32
    %10 = vector.broadcast %cst_15 : f32 to vector<160x8xf32>
    %11 = arith.maximumf %9, %10 : vector<160x8xf32>
    %12 = arith.truncf %11 : vector<160x8xf32> to vector<160x8xbf16>
    %13 = vector.shape_cast %12 : vector<160x8xbf16> to vector<1x10x16x8xbf16>
    %cst_16 = arith.constant 0.000000e+00 : bf16
    %14 = vector.broadcast %cst_16 : bf16 to vector<1x10x1x8xbf16>
    %c0_17 = arith.constant 0 : index
    %c0_18 = arith.constant 0 : index
    %c0_19 = arith.constant 0 : index
    %c0_20 = arith.constant 0 : index
    %15 = vector.load %arg12[%c0_17, %c0_18, %c0_19, %c0_20] : memref<1x10x24x24xbf16, #tpu.memory_space<vmem>>, vector<1x10x1x8xbf16>
    tpu.vector_store %arg12[%c0_17, %c0_18, %c0_19, %c0_20], %14 {strides = array<i32>} : memref<1x10x24x24xbf16, #tpu.memory_space<vmem>>, vector<1x10x1x8xbf16>,
    %c0_21 = arith.constant 0 : index
    %c0_22 = arith.constant 0 : index
    %c15 = arith.constant 15 : index
    %c16 = arith.constant 16 : index
    %16 = vector.load %arg12[%c0_21, %c0_22, %c15, %c16] : memref<1x10x24x24xbf16, #tpu.memory_space<vmem>>, vector<1x10x1x8xbf16>
    tpu.vector_store %arg12[%c0_21, %c0_22, %c15, %c16], %14 {strides = array<i32>} : memref<1x10x24x24xbf16, #tpu.memory_space<vmem>>, vector<1x10x1x8xbf16>,
    %cst_23 = arith.constant 0.000000e+00 : bf16
    %17 = vector.broadcast %cst_23 : bf16 to vector<1x10x8x24xbf16>
    %c0_24 = arith.constant 0 : index
    %c0_25 = arith.constant 0 : index
    %c16_26 = arith.constant 16 : index
    %c0_27 = arith.constant 0 : index
    %18 = vector.load %arg12[%c0_24, %c0_25, %c16_26, %c0_27] : memref<1x10x24x24xbf16, #tpu.memory_space<vmem>>, vector<1x10x8x24xbf16>
    tpu.vector_store %arg12[%c0_24, %c0_25, %c16_26, %c0_27], %17 {strides = array<i32>} : memref<1x10x24x24xbf16, #tpu.memory_space<vmem>>, vector<1x10x8x24xbf16>,
    %c0_28 = arith.constant 0 : index
    %c0_29 = arith.constant 0 : index
    %c1 = arith.constant 1 : index
    %c0_30 = arith.constant 0 : index
    %19 = vector.load %arg12[%c0_28, %c0_29, %c1, %c0_30] : memref<1x10x24x24xbf16, #tpu.memory_space<vmem>>, vector<1x10x16x8xbf16>
    tpu.vector_store %arg12[%c0_28, %c0_29, %c1, %c0_30], %13 {strides = array<i32>} : memref<1x10x24x24xbf16, #tpu.memory_space<vmem>>, vector<1x10x16x8xbf16>,
    %c0_31 = arith.constant 0 : index
    %c0_32 = arith.constant 0 : index
    %c0_33 = arith.constant 0 : index
    %c8 = arith.constant 8 : index
    %20 = vector.load %arg12[%c0_31, %c0_32, %c0_33, %c8] : memref<1x10x24x24xbf16, #tpu.memory_space<vmem>>, vector<1x10x16x8xbf16>
    tpu.vector_store %arg12[%c0_31, %c0_32, %c0_33, %c8], %13 {strides = array<i32>} : memref<1x10x24x24xbf16, #tpu.memory_space<vmem>>, vector<1x10x16x8xbf16>,
    %21 = vector.extract_strided_slice %13 {offsets = [0, 0, 1, 0], sizes = [1, 10, 15, 8], strides = [1, 1, 1, 1]} : vector<1x10x16x8xbf16> to vector<1x10x15x8xbf16>
    %c0_34 = arith.constant 0 : index
    %c0_35 = arith.constant 0 : index
    %c0_36 = arith.constant 0 : index
    %c16_37 = arith.constant 16 : index
    %22 = vector.load %arg12[%c0_34, %c0_35, %c0_36, %c16_37] : memref<1x10x24x24xbf16, #tpu.memory_space<vmem>>, vector<1x10x15x8xbf16>
    tpu.vector_store %arg12[%c0_34, %c0_35, %c0_36, %c16_37], %21 {strides = array<i32>} : memref<1x10x24x24xbf16, #tpu.memory_space<vmem>>, vector<1x10x15x8xbf16>,
    %c0_i32 = arith.constant 0 : i32
    %23 = arith.cmpi eq, %arg1, %c0_i32 : i32
    %24 = arith.extui %23 : i1 to i32
    %c0_i32_38 = arith.constant 0 : i32
    %25 = arith.cmpi ne, %24, %c0_i32_38 : i32
    scf.if %25 {
      %cst_80 = arith.constant 0.000000e+00 : bf16
      %69 = vector.broadcast %cst_80 : bf16 to vector<1x1x24x24xbf16>
      %c0_81 = arith.constant 0 : index
      %c0_82 = arith.constant 0 : index
      %c0_83 = arith.constant 0 : index
      %c0_84 = arith.constant 0 : index
      %70 = vector.load %arg12[%c0_81, %c0_82, %c0_83, %c0_84] : memref<1x10x24x24xbf16, #tpu.memory_space<vmem>>, vector<1x1x24x24xbf16>
      tpu.vector_store %arg12[%c0_81, %c0_82, %c0_83, %c0_84], %69 {strides = array<i32>} : memref<1x10x24x24xbf16, #tpu.memory_space<vmem>>, vector<1x1x24x24xbf16>,
    } else {
    }
    %c1_i32 = arith.constant 1 : i32
    %26 = arith.cmpi eq, %arg1, %c1_i32 : i32
    %27 = arith.extui %26 : i1 to i32
    %c0_i32_39 = arith.constant 0 : i32
    %28 = arith.cmpi ne, %27, %c0_i32_39 : i32
    scf.if %28 {
      %cst_80 = arith.constant 0.000000e+00 : bf16
      %69 = vector.broadcast %cst_80 : bf16 to vector<1x1x24x24xbf16>
      %c0_81 = arith.constant 0 : index
      %c9 = arith.constant 9 : index
      %c0_82 = arith.constant 0 : index
      %c0_83 = arith.constant 0 : index
      %70 = vector.load %arg12[%c0_81, %c9, %c0_82, %c0_83] : memref<1x10x24x24xbf16, #tpu.memory_space<vmem>>, vector<1x1x24x24xbf16>
      tpu.vector_store %arg12[%c0_81, %c9, %c0_82, %c0_83], %69 {strides = array<i32>} : memref<1x10x24x24xbf16, #tpu.memory_space<vmem>>, vector<1x1x24x24xbf16>,
    } else {
    }
    %c0_40 = arith.constant 0 : index
    %c0_41 = arith.constant 0 : index
    %c0_42 = arith.constant 0 : index
    %c0_43 = arith.constant 0 : index
    %29 = vector.load %arg12[%c0_40, %c0_41, %c0_42, %c0_43] : memref<1x10x24x24xbf16, #tpu.memory_space<vmem>>, vector<1x8x24x24xbf16>
    %30 = vector.shape_cast %29 : vector<1x8x24x24xbf16> to vector<192x24xbf16>
    %c0_44 = arith.constant 0 : index
    %c0_45 = arith.constant 0 : index
    %c0_46 = arith.constant 0 : index
    %31 = vector.load %arg7[%c0_44, %c0_45, %c0_46] : memref<3x24x8xbf16, #tpu.memory_space<vmem>>, vector<1x24x8xbf16>
    %32 = vector.shape_cast %31 : vector<1x24x8xbf16> to vector<24x8xbf16>
    %cst_47 = arith.constant dense<0.000000e+00> : vector<192x8xf32>
    %33 = tpu.matmul %30, %32, %cst_47 {dimension_numbers = #tpu.dot_dimension_numbers<[1], [0], [0], [1], [0, 0, 1, 1], [], []>} : vector<192x24xbf16>, vector<24x8xbf16>, vector<192x8xf32> -> vector<192x8xf32>
    %c0_48 = arith.constant 0 : index
    %c1_49 = arith.constant 1 : index
    %c0_50 = arith.constant 0 : index
    %c0_51 = arith.constant 0 : index
    %34 = vector.load %arg12[%c0_48, %c1_49, %c0_50, %c0_51] : memref<1x10x24x24xbf16, #tpu.memory_space<vmem>>, vector<1x8x24x24xbf16>
    %35 = vector.shape_cast %34 : vector<1x8x24x24xbf16> to vector<192x24xbf16>
    %c1_52 = arith.constant 1 : index
    %c0_53 = arith.constant 0 : index
    %c0_54 = arith.constant 0 : index
    %36 = vector.load %arg7[%c1_52, %c0_53, %c0_54] : memref<3x24x8xbf16, #tpu.memory_space<vmem>>, vector<1x24x8xbf16>
    %37 = vector.shape_cast %36 : vector<1x24x8xbf16> to vector<24x8xbf16>
    %cst_55 = arith.constant dense<0.000000e+00> : vector<192x8xf32>
    %38 = tpu.matmul %35, %37, %cst_55 {dimension_numbers = #tpu.dot_dimension_numbers<[1], [0], [0], [1], [0, 0, 1, 1], [], []>} : vector<192x24xbf16>, vector<24x8xbf16>, vector<192x8xf32> -> vector<192x8xf32>
    %39 = arith.addf %33, %38 : vector<192x8xf32>
    %c0_56 = arith.constant 0 : index
    %c2 = arith.constant 2 : index
    %c0_57 = arith.constant 0 : index
    %c0_58 = arith.constant 0 : index
    %40 = vector.load %arg12[%c0_56, %c2, %c0_57, %c0_58] : memref<1x10x24x24xbf16, #tpu.memory_space<vmem>>, vector<1x8x24x24xbf16>
    %41 = vector.shape_cast %40 : vector<1x8x24x24xbf16> to vector<192x24xbf16>
    %c2_59 = arith.constant 2 : index
    %c0_60 = arith.constant 0 : index
    %c0_61 = arith.constant 0 : index
    %42 = vector.load %arg7[%c2_59, %c0_60, %c0_61] : memref<3x24x8xbf16, #tpu.memory_space<vmem>>, vector<1x24x8xbf16>
    %43 = vector.shape_cast %42 : vector<1x24x8xbf16> to vector<24x8xbf16>
    %cst_62 = arith.constant dense<0.000000e+00> : vector<192x8xf32>
    %44 = tpu.matmul %41, %43, %cst_62 {dimension_numbers = #tpu.dot_dimension_numbers<[1], [0], [0], [1], [0, 0, 1, 1], [], []>} : vector<192x24xbf16>, vector<24x8xbf16>, vector<192x8xf32> -> vector<192x8xf32>
    %45 = arith.addf %39, %44 : vector<192x8xf32>
    %c0_63 = arith.constant 0 : index
    %c0_64 = arith.constant 0 : index
    %46 = vector.load %arg8[%c0_63, %c0_64] : memref<1x8xf32, #tpu.memory_space<vmem>>, vector<1x8xf32>
    %47 = vector.broadcast %46 : vector<1x8xf32> to vector<192x8xf32>
    %48 = arith.addf %45, %47 : vector<192x8xf32>
    %cst_65 = arith.constant 0.000000e+00 : f32
    %49 = vector.broadcast %cst_65 : f32 to vector<192x8xf32>
    %50 = arith.maximumf %48, %49 : vector<192x8xf32>
    %51 = arith.truncf %50 : vector<192x8xf32> to vector<192x8xbf16>
    %52 = vector.shape_cast %51 : vector<192x8xbf16> to vector<1x8x24x8xbf16>
    %53 = vector.extract_strided_slice %52 {offsets = [0, 0, 0, 0], sizes = [1, 8, 16, 8], strides = [1, 1, 1, 1]} : vector<1x8x24x8xbf16> to vector<1x8x16x8xbf16>
    %54 = vector.shape_cast %53 : vector<1x8x16x8xbf16> to vector<128x8xbf16>
    %c0_66 = arith.constant 0 : index
    %c0_67 = arith.constant 0 : index
    %55 = vector.load %arg9[%c0_66, %c0_67] : memref<8x32xbf16, #tpu.memory_space<vmem>>, vector<8x32xbf16>
    %cst_68 = arith.constant dense<0.000000e+00> : vector<128x32xf32>
    %56 = tpu.matmul %54, %55, %cst_68 {dimension_numbers = #tpu.dot_dimension_numbers<[1], [0], [0], [1], [0, 0, 1, 1], [], []>} : vector<128x8xbf16>, vector<8x32xbf16>, vector<128x32xf32> -> vector<128x32xf32>
    %c0_69 = arith.constant 0 : index
    %c0_70 = arith.constant 0 : index
    %57 = vector.load %arg10[%c0_69, %c0_70] : memref<1x32xf32, #tpu.memory_space<vmem>>, vector<1x32xf32>
    %58 = vector.broadcast %57 : vector<1x32xf32> to vector<128x32xf32>
    %59 = arith.addf %56, %58 : vector<128x32xf32>
    %c0_71 = arith.constant 0 : index
    %c0_72 = arith.constant 0 : index
    %c0_73 = arith.constant 0 : index
    %c0_74 = arith.constant 0 : index
    %60 = vector.load %arg2[%c0_71, %c0_72, %c0_73, %c0_74] : memref<1x8x16x32xbf16, #tpu.memory_space<vmem>>, vector<1x8x16x32xbf16>
    %61 = vector.shape_cast %60 : vector<1x8x16x32xbf16> to vector<128x32xbf16>
    %62 = arith.extf %61 : vector<128x32xbf16> to vector<128x32xf32>
    %63 = arith.addf %59, %62 : vector<128x32xf32>
    %cst_75 = arith.constant 0.000000e+00 : f32
    %64 = vector.broadcast %cst_75 : f32 to vector<128x32xf32>
    %65 = arith.maximumf %63, %64 : vector<128x32xf32>
    %66 = vector.shape_cast %65 : vector<128x32xf32> to vector<1x8x16x32xf32>
    %67 = arith.truncf %66 : vector<1x8x16x32xf32> to vector<1x8x16x32xbf16>
    %c0_76 = arith.constant 0 : index
    %c0_77 = arith.constant 0 : index
    %c0_78 = arith.constant 0 : index
    %c0_79 = arith.constant 0 : index
    %68 = vector.load %arg11[%c0_76, %c0_77, %c0_78, %c0_79] : memref<1x8x16x32xbf16, #tpu.memory_space<vmem>>, vector<1x8x16x32xbf16>
    tpu.vector_store %arg11[%c0_76, %c0_77, %c0_78, %c0_79], %67 {strides = array<i32>} : memref<1x8x16x32xbf16, #tpu.memory_space<vmem>>, vector<1x8x16x32xbf16>,
    return
  }
  func.func @transform_0(%arg0: i32, %arg1: i32) -> (i32, i32, i32, i32) {
    %c0_i32 = arith.constant 0 : i32
    %c0_i32_0 = arith.constant 0 : i32
    %c0_i32_1 = arith.constant 0 : i32
    return %arg0, %arg1, %c0_i32, %c0_i32_0 : i32, i32, i32, i32
  }
  func.func @transform_1(%arg0: i32, %arg1: i32) -> (i32, i32, i32, i32) {
    %c8_i32 = arith.constant 8 : i32
    %0 = arith.muli %arg1, %c8_i32 : i32
    %c1_i32 = arith.constant 1 : i32
    %1 = arith.subi %0, %c1_i32 : i32
    %c0_i32 = arith.constant 0 : i32
    %2 = arith.maxsi %1, %c0_i32 : i32
    %c0_i32_0 = arith.constant 0 : i32
    %c0_i32_1 = arith.constant 0 : i32
    %c0_i32_2 = arith.constant 0 : i32
    return %arg0, %2, %c0_i32_0, %c0_i32_1 : i32, i32, i32, i32
  }
  func.func @transform_2(%arg0: i32, %arg1: i32) -> (i32, i32, i32, i32) {
    %c8_i32 = arith.constant 8 : i32
    %0 = arith.muli %arg1, %c8_i32 : i32
    %c8_i32_0 = arith.constant 8 : i32
    %1 = arith.addi %0, %c8_i32_0 : i32
    %c15_i32 = arith.constant 15 : i32
    %2 = arith.minsi %1, %c15_i32 : i32
    %c0_i32 = arith.constant 0 : i32
    %c0_i32_1 = arith.constant 0 : i32
    %c0_i32_2 = arith.constant 0 : i32
    return %arg0, %2, %c0_i32, %c0_i32_1 : i32, i32, i32, i32
  }
  func.func @transform_3(%arg0: i32, %arg1: i32) -> (i32, i32) {
    %c0_i32 = arith.constant 0 : i32
    %c0_i32_0 = arith.constant 0 : i32
    %c0_i32_1 = arith.constant 0 : i32
    return %c0_i32, %c0_i32_0 : i32, i32
  }
  func.func @transform_4(%arg0: i32, %arg1: i32) -> (i32, i32) {
    %c0_i32 = arith.constant 0 : i32
    %c0_i32_0 = arith.constant 0 : i32
    %c0_i32_1 = arith.constant 0 : i32
    return %c0_i32, %c0_i32_0 : i32, i32
  }
  func.func @transform_5(%arg0: i32, %arg1: i32) -> (i32, i32, i32) {
    %c0_i32 = arith.constant 0 : i32
    %c0_i32_0 = arith.constant 0 : i32
    %c0_i32_1 = arith.constant 0 : i32
    %c0_i32_2 = arith.constant 0 : i32
    return %c0_i32, %c0_i32_0, %c0_i32_1 : i32, i32, i32
  }
  func.func @transform_6(%arg0: i32, %arg1: i32) -> (i32, i32) {
    %c0_i32 = arith.constant 0 : i32
    %c0_i32_0 = arith.constant 0 : i32
    %c0_i32_1 = arith.constant 0 : i32
    return %c0_i32, %c0_i32_0 : i32, i32
  }
  func.func @transform_7(%arg0: i32, %arg1: i32) -> (i32, i32) {
    %c0_i32 = arith.constant 0 : i32
    %c0_i32_0 = arith.constant 0 : i32
    %c0_i32_1 = arith.constant 0 : i32
    return %c0_i32, %c0_i32_0 : i32, i32
  }
  func.func @transform_8(%arg0: i32, %arg1: i32) -> (i32, i32) {
    %c0_i32 = arith.constant 0 : i32
    %c0_i32_0 = arith.constant 0 : i32
    %c0_i32_1 = arith.constant 0 : i32
    return %c0_i32, %c0_i32_0 : i32, i32
  }
  func.func @transform_9(%arg0: i32, %arg1: i32) -> (i32, i32, i32, i32) {
    %c0_i32 = arith.constant 0 : i32
    %c0_i32_0 = arith.constant 0 : i32
    %c0_i32_1 = arith.constant 0 : i32
    return %arg0, %arg1, %c0_i32, %c0_i32_0 : i32, i32, i32, i32
  }
}

</mosaic_0001>

<llo_original>
// kernel: bottleneck_forward_nhwc.1
$region0: #{bottleneck_forward_nhwc.1}
  #allocation0 [shape = 'u32[]', space=smem, size = 0x4, offset = 0x4, fixed_abs, tag = 'smem constant byte address 0x4 - core index']
  #allocation1 [shape = 'u32[144,128]{1,0:T(1,128)}', space=vmem, size = 0x12000, scoped, tag = 'internal scratch']
  #allocation2 [shape = 'bf16[1,10,24,24]{3,2,1,0:T(8,128)(2,1)}', space=vmem, size = 0xf000, scoped, tag = 'scratch operand']
  %s0 = inlined_call_operand.vmem [shape: bf16[2,16,16,32], index: 0, kind: input, shape index: {}, may-alias: {0,1,2}]
  %s1 = inlined_call_operand.vmem [shape: bf16[2,16,16,32], index: 1, kind: input, shape index: {}, may-alias: {0,1,2}]
  %s2 = inlined_call_operand.vmem [shape: bf16[2,16,16,32], index: 2, kind: input, shape index: {}, may-alias: {0,1,2}]
  %s3 = inlined_call_operand.vmem [shape: bf16[32,8], index: 3, kind: input, shape index: {}]
  %s4 = inlined_call_operand.vmem [shape: f32[1,8], index: 4, kind: input, shape index: {}]
  %s5 = inlined_call_operand.vmem [shape: bf16[3,24,8], index: 5, kind: input, shape index: {}]
  %s6 = inlined_call_operand.vmem [shape: f32[1,8], index: 6, kind: input, shape index: {}]
  %s7 = inlined_call_operand.vmem [shape: bf16[8,32], index: 7, kind: input, shape index: {}]
  %s8 = inlined_call_operand.vmem [shape: f32[1,32], index: 8, kind: input, shape index: {}]
  %s9 = inlined_call_operand.hbm [shape: bf16[2,16,16,32], index: 9, kind: output, shape index: {}]
  %s10 = sld [smem:[#allocation0]]
  $region77: #{bottleneck_forward_nhwc.1} parent=0
    _
  %s12 = ssub.s32 1, %s10
  %s13 = scalar_select 0, %s12, %s10
  $region1: #{bottleneck_forward_nhwc.1} parent=0
    #allocation3 [shape = 'u8[65536]{0}', space=vmem, size = 0x10000, scoped, tag = 'output window, operand 0']
    #allocation4 [shape = 's32[2]{0}', space=sflag, size = 0x8, scoped, tag = 'scoped memory for bottleneck_forward_nhwc.1']
    %14 = vsyncpa [#allocation4], 0
    %s15 = scalar_lea.sflag [#allocation4], 1
    %16 = vsyncpa %s15, 0
    loop: start=0, step=1, limit=6
    $region2: #{bottleneck_forward_nhwc.1} parent=1 // loop_pre_header
      _
    $region3: #{bottleneck_forward_nhwc.1} parent=1 // loop_header
      %s18 = sphi 0, %s22
      %p19 = scmp.ge.s32.totalorder %s18, 6
      %s25 = sphi 0, %s37
      %s26 = sphi 0, %s33
      %s27 = sphi 0, %s25
      %s28 = sphi 0, %s26
      %s29 = sphi 0, %s27
      %s30 = sphi 0, %s28
      %s42 = sphi 0, %s44
      %s45 = sphi 0, %s42
      %s46 = sphi 0, %s45
      %s62 = sphi 0, %s46
      %s78 = sphi 0, %s80
      %s81 = sphi 0, %s78
      %s82 = sphi 0, %s81
      %s98 = sphi 0, %s82
      %s114 = sphi 0, %s116
      %s117 = sphi 0, %s114
      %s118 = sphi 0, %s117
      %s134 = sphi 0, %s118
      %s138 = sphi 0, %s138
      %s140 = sphi 0, %s138
      %s141 = sphi 0, %s140
      %s155 = sphi 0, %s141
      %s159 = sphi 0, %s159
      %s161 = sphi 0, %s159
      %s162 = sphi 0, %s161
      %s176 = sphi 0, %s162
      %s180 = sphi 0, %s180
      %s182 = sphi 0, %s180
      %s183 = sphi 0, %s182
      %s197 = sphi 0, %s183
      %s201 = sphi 0, %s201
      %s203 = sphi 0, %s201
      %s204 = sphi 0, %s203
      %s218 = sphi 0, %s204
      %s222 = sphi 0, %s222
      %s224 = sphi 0, %s222
      %s225 = sphi 0, %s224
      %s239 = sphi 0, %s225
      %s243 = sphi 0, %s243
      %s245 = sphi 0, %s243
      %s246 = sphi 0, %s245
      %s260 = sphi 0, %s246
      %s268 = sphi 0, %s270
      %s271 = sphi 0, %s268
      %s272 = sphi 0, %s271
      %s288 = sphi 0, %s272
    $region4: #{bottleneck_forward_nhwc.1} parent=1 // loop_header_branch
      %21 = sbr.rel (%p19) target = $region8
    $region5: #{bottleneck_forward_nhwc.1} parent=1 // loop_body
      %s23 = ssub.s32 %s18, 1
      %s24 = ssub.s32 %s18, 2
      %s31 = sadd.s32 1, %s26
      %p32 = scmp.ge.s32.totalorder %s31, 2
      %s33 = scalar_select %p32, 0, %s31
      %s34 = sadd.s32 1, %s25
      %s35 = scalar_select %p32, %s34, %s25
      %p36 = scmp.ge.s32.totalorder %s35, 2
      %s37 = scalar_select %p36, 0, %s35
      %s38 = ssub.s32 %s25, %s37
      %s39 = ssub.s32 %s26, %s33
      %s40 = sor.u32 %s38, %s39
      %p41 = scmp.eq.s32.totalorder %s40, 0
      %s43 = sadd.s32 %s42, 1
      %s44 = scalar_select %p41, %s42, %s43
      %p47 = pneg %p41
      %p48 = scmp.eq.s32.totalorder %s18, 3
      %p49 = por %p47, %p48
      %p50 = scmp.ne.s32.totalorder %s42, %s45
      %p51 = scmp.eq.s32.totalorder %s18, 0
      %p52 = por %p50, %p51
      %p53 = scmp.ne.s32.totalorder %s42, %s45
      %p54 = scmp.eq.s32.totalorder %s23, 3
      %p55 = por %p53, %p54
      %p56 = scmp.ne.s32.totalorder %s45, %s46
      %p57 = scmp.eq.s32.totalorder %s23, 0
      %p58 = por %p56, %p57
      %p59 = scmp.ne.s32.totalorder %s45, %s46
      %p60 = scmp.eq.s32.totalorder %s24, 3
      %p61 = por %p59, %p60
      %p63 = scmp.ne.s32.totalorder %s46, %s62
      %p64 = scmp.eq.s32.totalorder %s24, 0
      %p65 = por %p63, %p64
      %s66 = smul.u32 %s26, 8
      %s67 = ssub.s32 %s66, 1
      %p68 = scmp.gt.s32.totalorder %s67, 0
      %s69 = scalar_select %p68, %s67, 0
      %s70 = smul.u32 %s33, 8
      %s71 = ssub.s32 %s70, 1
      %p72 = scmp.gt.s32.totalorder %s71, 0
      %s73 = scalar_select %p72, %s71, 0
      %s74 = ssub.s32 %s25, %s37
      %s75 = ssub.s32 %s69, %s73
      %s76 = sor.u32 %s74, %s75
      %p77 = scmp.eq.s32.totalorder %s76, 0
      %s79 = sadd.s32 %s78, 1
      %s80 = scalar_select %p77, %s78, %s79
      %p83 = pneg %p77
      %p84 = scmp.eq.s32.totalorder %s18, 3
      %p85 = por %p83, %p84
      %p86 = scmp.ne.s32.totalorder %s78, %s81
      %p87 = scmp.eq.s32.totalorder %s18, 0
      %p88 = por %p86, %p87
      %p89 = scmp.ne.s32.totalorder %s78, %s81
      %p90 = scmp.eq.s32.totalorder %s23, 3
      %p91 = por %p89, %p90
      %p92 = scmp.ne.s32.totalorder %s81, %s82
      %p93 = scmp.eq.s32.totalorder %s23, 0
      %p94 = por %p92, %p93
      %p95 = scmp.ne.s32.totalorder %s81, %s82
      %p96 = scmp.eq.s32.totalorder %s24, 3
      %p97 = por %p95, %p96
      %p99 = scmp.ne.s32.totalorder %s82, %s98
      %p100 = scmp.eq.s32.totalorder %s24, 0
      %p101 = por %p99, %p100
      %s102 = smul.u32 %s26, 8
      %s103 = sadd.s32 %s102, 8
      %p104 = scmp.lt.s32.totalorder %s103, 15
      %s105 = scalar_select %p104, %s103, 15
      %s106 = smul.u32 %s33, 8
      %s107 = sadd.s32 %s106, 8
      %p108 = scmp.lt.s32.totalorder %s107, 15
      %s109 = scalar_select %p108, %s107, 15
      %s110 = ssub.s32 %s25, %s37
      %s111 = ssub.s32 %s105, %s109
      %s112 = sor.u32 %s110, %s111
      %p113 = scmp.eq.s32.totalorder %s112, 0
      %s115 = sadd.s32 %s114, 1
      %s116 = scalar_select %p113, %s114, %s115
      %p119 = pneg %p113
      %p120 = scmp.eq.s32.totalorder %s18, 3
      %p121 = por %p119, %p120
      %p122 = scmp.ne.s32.totalorder %s114, %s117
      %p123 = scmp.eq.s32.totalorder %s18, 0
      %p124 = por %p122, %p123
      %p125 = scmp.ne.s32.totalorder %s114, %s117
      %p126 = scmp.eq.s32.totalorder %s23, 3
      %p127 = por %p125, %p126
      %p128 = scmp.ne.s32.totalorder %s117, %s118
      %p129 = scmp.eq.s32.totalorder %s23, 0
      %p130 = por %p128, %p129
      %p131 = scmp.ne.s32.totalorder %s117, %s118
      %p132 = scmp.eq.s32.totalorder %s24, 3
      %p133 = por %p131, %p132
      %p135 = scmp.ne.s32.totalorder %s118, %s134
      %p136 = scmp.eq.s32.totalorder %s24, 0
      %p137 = por %p135, %p136
      %s139 = sadd.s32 %s138, 1
      %p142 = scmp.eq.s32.totalorder %s18, 3
      %p143 = scmp.ne.s32.totalorder %s138, %s140
      %p144 = scmp.eq.s32.totalorder %s18, 0
      %p145 = por %p143, %p144
      %p146 = scmp.ne.s32.totalorder %s138, %s140
      %p147 = scmp.eq.s32.totalorder %s23, 3
      %p148 = por %p146, %p147
      %p149 = scmp.ne.s32.totalorder %s140, %s141
      %p150 = scmp.eq.s32.totalorder %s23, 0
      %p151 = por %p149, %p150
      %p152 = scmp.ne.s32.totalorder %s140, %s141
      %p153 = scmp.eq.s32.totalorder %s24, 3
      %p154 = por %p152, %p153
      %p156 = scmp.ne.s32.totalorder %s141, %s155
      %p157 = scmp.eq.s32.totalorder %s24, 0
      %p158 = por %p156, %p157
      %s160 = sadd.s32 %s159, 1
      %p163 = scmp.eq.s32.totalorder %s18, 3
      %p164 = scmp.ne.s32.totalorder %s159, %s161
      %p165 = scmp.eq.s32.totalorder %s18, 0
      %p166 = por %p164, %p165
      %p167 = scmp.ne.s32.totalorder %s159, %s161
      %p168 = scmp.eq.s32.totalorder %s23, 3
      %p169 = por %p167, %p168
      %p170 = scmp.ne.s32.totalorder %s161, %s162
      %p171 = scmp.eq.s32.totalorder %s23, 0
      %p172 = por %p170, %p171
      %p173 = scmp.ne.s32.totalorder %s161, %s162
      %p174 = scmp.eq.s32.totalorder %s24, 3
      %p175 = por %p173, %p174
      %p177 = scmp.ne.s32.totalorder %s162, %s176
      %p178 = scmp.eq.s32.totalorder %s24, 0
      %p179 = por %p177, %p178
      %s181 = sadd.s32 %s180, 1
      %p184 = scmp.eq.s32.totalorder %s18, 3
      %p185 = scmp.ne.s32.totalorder %s180, %s182
      %p186 = scmp.eq.s32.totalorder %s18, 0
      %p187 = por %p185, %p186
      %p188 = scmp.ne.s32.totalorder %s180, %s182
      %p189 = scmp.eq.s32.totalorder %s23, 3
      %p190 = por %p188, %p189
      %p191 = scmp.ne.s32.totalorder %s182, %s183
      %p192 = scmp.eq.s32.totalorder %s23, 0
      %p193 = por %p191, %p192
      %p194 = scmp.ne.s32.totalorder %s182, %s183
      %p195 = scmp.eq.s32.totalorder %s24, 3
      %p196 = por %p194, %p195
      %p198 = scmp.ne.s32.totalorder %s183, %s197
      %p199 = scmp.eq.s32.totalorder %s24, 0
      %p200 = por %p198, %p199
      %s202 = sadd.s32 %s201, 1
      %p205 = scmp.eq.s32.totalorder %s18, 3
      %p206 = scmp.ne.s32.totalorder %s201, %s203
      %p207 = scmp.eq.s32.totalorder %s18, 0
      %p208 = por %p206, %p207
      %p209 = scmp.ne.s32.totalorder %s201, %s203
      %p210 = scmp.eq.s32.totalorder %s23, 3
      %p211 = por %p209, %p210
      %p212 = scmp.ne.s32.totalorder %s203, %s204
      %p213 = scmp.eq.s32.totalorder %s23, 0
      %p214 = por %p212, %p213
      %p215 = scmp.ne.s32.totalorder %s203, %s204
      %p216 = scmp.eq.s32.totalorder %s24, 3
      %p217 = por %p215, %p216
      %p219 = scmp.ne.s32.totalorder %s204, %s218
      %p220 = scmp.eq.s32.totalorder %s24, 0
      %p221 = por %p219, %p220
      %s223 = sadd.s32 %s222, 1
      %p226 = scmp.eq.s32.totalorder %s18, 3
      %p227 = scmp.ne.s32.totalorder %s222, %s224
      %p228 = scmp.eq.s32.totalorder %s18, 0
      %p229 = por %p227, %p228
      %p230 = scmp.ne.s32.totalorder %s222, %s224
      %p231 = scmp.eq.s32.totalorder %s23, 3
      %p232 = por %p230, %p231
      %p233 = scmp.ne.s32.totalorder %s224, %s225
      %p234 = scmp.eq.s32.totalorder %s23, 0
      %p235 = por %p233, %p234
      %p236 = scmp.ne.s32.totalorder %s224, %s225
      %p237 = scmp.eq.s32.totalorder %s24, 3
      %p238 = por %p236, %p237
      %p240 = scmp.ne.s32.totalorder %s225, %s239
      %p241 = scmp.eq.s32.totalorder %s24, 0
      %p242 = por %p240, %p241
      %s244 = sadd.s32 %s243, 1
      %p247 = scmp.eq.s32.totalorder %s18, 3
      %p248 = scmp.ne.s32.totalorder %s243, %s245
      %p249 = scmp.eq.s32.totalorder %s18, 0
      %p250 = por %p248, %p249
      %p251 = scmp.ne.s32.totalorder %s243, %s245
      %p252 = scmp.eq.s32.totalorder %s23, 3
      %p253 = por %p251, %p252
      %p254 = scmp.ne.s32.totalorder %s245, %s246
      %p255 = scmp.eq.s32.totalorder %s23, 0
      %p256 = por %p254, %p255
      %p257 = scmp.ne.s32.totalorder %s245, %s246
      %p258 = scmp.eq.s32.totalorder %s24, 3
      %p259 = por %p257, %p258
      %p261 = scmp.ne.s32.totalorder %s246, %s260
      %p262 = scmp.eq.s32.totalorder %s24, 0
      %p263 = por %p261, %p262
      %s264 = ssub.s32 %s25, %s37
      %s265 = ssub.s32 %s26, %s33
      %s266 = sor.u32 %s264, %s265
      %p267 = scmp.eq.s32.totalorder %s266, 0
      %s269 = sadd.s32 %s268, 1
      %s270 = scalar_select %p267, %s268, %s269
      %p273 = pneg %p267
      %p274 = scmp.eq.s32.totalorder %s18, 3
      %p275 = por %p273, %p274
      %p276 = scmp.ne.s32.totalorder %s268, %s271
      %p277 = scmp.eq.s32.totalorder %s18, 0
      %p278 = por %p276, %p277
      %p279 = scmp.ne.s32.totalorder %s268, %s271
      %p280 = scmp.eq.s32.totalorder %s23, 3
      %p281 = por %p279, %p280
      %p282 = scmp.ne.s32.totalorder %s271, %s272
      %p283 = scmp.eq.s32.totalorder %s23, 0
      %p284 = por %p282, %p283
      %p285 = scmp.ne.s32.totalorder %s271, %s272
      %p286 = scmp.eq.s32.totalorder %s24, 3
      %p287 = por %p285, %p286
      %p289 = scmp.ne.s32.totalorder %s272, %s288
      %p290 = scmp.eq.s32.totalorder %s24, 0
      %p291 = por %p289, %p290
      %p292 = scmp.le.s32.totalorder 1, %s18
      %p293 = scmp.lt.s32.totalorder %s18, 5
      %p294 = pnand %p292, %p293
      %p295 = pneg %p294
      // Predicated region
      $region9: #{bottleneck_forward_nhwc.1} parent=5 // pred_check
        _
      $region10: #{bottleneck_forward_nhwc.1} parent=5 // pred_check_branch
        %297 = sbr.rel (%p294) target = $region12
      $region11: #{bottleneck_forward_nhwc.1} parent=5 // pred_region
        %s298 = ssub.s32 %s18, 1
        // Predicated region
        $region13: #{bottleneck_forward_nhwc.1} parent=11 // pred_check
          %p299 = pneg %p151
        $region14: #{bottleneck_forward_nhwc.1} parent=11 // pred_check_branch
          %301 = sbr.rel (%p299) target = $region16
        $region15: #{bottleneck_forward_nhwc.1} parent=11 // pred_region
          _
        $region16: #{bottleneck_forward_nhwc.1} parent=11 // pred_fallthru
          _
        // Predicated region
        $region17: #{bottleneck_forward_nhwc.1} parent=11 // pred_check
          %p302 = pneg %p172
        $region18: #{bottleneck_forward_nhwc.1} parent=11 // pred_check_branch
          %304 = sbr.rel (%p302) target = $region20
        $region19: #{bottleneck_forward_nhwc.1} parent=11 // pred_region
          _
        $region20: #{bottleneck_forward_nhwc.1} parent=11 // pred_fallthru
          _
        // Predicated region
        $region21: #{bottleneck_forward_nhwc.1} parent=11 // pred_check
          %p305 = pneg %p193
        $region22: #{bottleneck_forward_nhwc.1} parent=11 // pred_check_branch
          %307 = sbr.rel (%p305) target = $region24
        $region23: #{bottleneck_forward_nhwc.1} parent=11 // pred_region
          _
        $region24: #{bottleneck_forward_nhwc.1} parent=11 // pred_fallthru
          _
        // Predicated region
        $region25: #{bottleneck_forward_nhwc.1} parent=11 // pred_check
          %p308 = pneg %p214
        $region26: #{bottleneck_forward_nhwc.1} parent=11 // pred_check_branch
          %310 = sbr.rel (%p308) target = $region28
        $region27: #{bottleneck_forward_nhwc.1} parent=11 // pred_region
          _
        $region28: #{bottleneck_forward_nhwc.1} parent=11 // pred_fallthru
          _
        // Predicated region
        $region29: #{bottleneck_forward_nhwc.1} parent=11 // pred_check
          %p311 = pneg %p235
        $region30: #{bottleneck_forward_nhwc.1} parent=11 // pred_check_branch
          %313 = sbr.rel (%p311) target = $region32
        $region31: #{bottleneck_forward_nhwc.1} parent=11 // pred_region
          _
        $region32: #{bottleneck_forward_nhwc.1} parent=11 // pred_fallthru
          _
        // Predicated region
        $region33: #{bottleneck_forward_nhwc.1} parent=11 // pred_check
          %p314 = pneg %p256
        $region34: #{bottleneck_forward_nhwc.1} parent=11 // pred_check_branch
          %316 = sbr.rel (%p314) target = $region36
        $region35: #{bottleneck_forward_nhwc.1} parent=11 // pred_region
          _
        $region36: #{bottleneck_forward_nhwc.1} parent=11 // pred_fallthru
          _
      $region12: #{bottleneck_forward_nhwc.1} parent=5 // pred_fallthru
        _
      %p317 = scmp.lt.s32.totalorder %s18, 4
      // Predicated region
      $region37: #{bottleneck_forward_nhwc.1} parent=5 // pred_check
        %p318 = pneg %p317
      $region38: #{bottleneck_forward_nhwc.1} parent=5 // pred_check_branch
        %320 = sbr.rel (%p318) target = $region40
      $region39: #{bottleneck_forward_nhwc.1} parent=5 // pred_region
        // Predicated region
        $region41: #{bottleneck_forward_nhwc.1} parent=39 // pred_check
          %p321 = pneg %p52
        $region42: #{bottleneck_forward_nhwc.1} parent=39 // pred_check_branch
          %323 = sbr.rel (%p321) target = $region44
        $region43: #{bottleneck_forward_nhwc.1} parent=39 // pred_region
          %s324 = smul.u32 8, %s26
          %p325 = scmp.lt.s32.totalorder %s25, 1
          %s326 = scalar_select %p325, %s25, 1
          %p327 = scmp.lt.s32.totalorder %s324, 15
          %s328 = scalar_select %p327, %s324, 15
          %s329 = smul.addr %s328, 2
          %s330 = smul.addr %s326, 32
          %s331 = sadd.s32 %s329, %s330
          %s332 = smul.addr %s331, 4
          %s333 = scalar_lea.vmem %s0, %s332
          %s334 = smul.u32 8, %s26
        $region44: #{bottleneck_forward_nhwc.1} parent=39 // pred_fallthru
          _
        // Predicated region
        $region45: #{bottleneck_forward_nhwc.1} parent=39 // pred_check
          %p335 = pneg %p88
        $region46: #{bottleneck_forward_nhwc.1} parent=39 // pred_check_branch
          %337 = sbr.rel (%p335) target = $region48
        $region47: #{bottleneck_forward_nhwc.1} parent=39 // pred_region
          %s338 = smul.u32 %s26, 8
          %s339 = ssub.s32 %s338, 1
          %p340 = scmp.gt.s32.totalorder %s339, 0
          %s341 = scalar_select %p340, %s339, 0
          %p342 = scmp.lt.s32.totalorder %s25, 1
          %s343 = scalar_select %p342, %s25, 1
          %p344 = scmp.lt.s32.totalorder %s341, 15
          %s345 = scalar_select %p344, %s341, 15
          %s346 = smul.addr %s345, 2
          %s347 = smul.addr %s343, 32
          %s348 = sadd.s32 %s346, %s347
          %s349 = smul.addr %s348, 4
          %s350 = scalar_lea.vmem %s1, %s349
          %s351 = smul.u32 %s26, 8
          %s352 = ssub.s32 %s351, 1
          %p353 = scmp.gt.s32.totalorder %s352, 0
          %s354 = scalar_select %p353, %s352, 0
        $region48: #{bottleneck_forward_nhwc.1} parent=39 // pred_fallthru
          _
        // Predicated region
        $region49: #{bottleneck_forward_nhwc.1} parent=39 // pred_check
          %p355 = pneg %p124
        $region50: #{bottleneck_forward_nhwc.1} parent=39 // pred_check_branch
          %357 = sbr.rel (%p355) target = $region52
        $region51: #{bottleneck_forward_nhwc.1} parent=39 // pred_region
          %s358 = smul.u32 %s26, 8
          %s359 = sadd.s32 %s358, 8
          %p360 = scmp.lt.s32.totalorder %s359, 15
          %s361 = scalar_select %p360, %s359, 15
          %p362 = scmp.lt.s32.totalorder %s25, 1
          %s363 = scalar_select %p362, %s25, 1
          %p364 = scmp.lt.s32.totalorder %s361, 15
          %s365 = scalar_select %p364, %s361, 15
          %s366 = smul.addr %s365, 2
          %s367 = smul.addr %s363, 32
          %s368 = sadd.s32 %s366, %s367
          %s369 = smul.addr %s368, 4
          %s370 = scalar_lea.vmem %s2, %s369
          %s371 = smul.u32 %s26, 8
          %s372 = sadd.s32 %s371, 8
          %p373 = scmp.lt.s32.totalorder %s372, 15
          %s374 = scalar_select %p373, %s372, 15
        $region52: #{bottleneck_forward_nhwc.1} parent=39 // pred_fallthru
          _
      $region40: #{bottleneck_forward_nhwc.1} parent=5 // pred_fallthru
        _
      %p375 = scmp.le.s32.totalorder 1, %s18
      %p376 = scmp.lt.s32.totalorder %s18, 5
      %p377 = pnand %p375, %p376
      %p378 = pneg %p377
      // Predicated region
      $region53: #{bottleneck_forward_nhwc.1} parent=5 // pred_check
        _
      $region54: #{bottleneck_forward_nhwc.1} parent=5 // pred_check_branch
        %380 = sbr.rel (%p377) target = $region56
      $region55: #{bottleneck_forward_nhwc.1} parent=5 // pred_region
        %s381 = ssub.s32 %s18, 1
        %s382 = smul.u32 8, %s28
        %p383 = scmp.lt.s32.totalorder %s27, 1
        %s384 = scalar_select %p383, %s27, 1
        %p385 = scmp.lt.s32.totalorder %s382, 15
        %s386 = scalar_select %p385, %s382, 15
        %s387 = smul.addr %s386, 2
        %s388 = smul.addr %s384, 32
        %s389 = sadd.s32 %s387, %s388
        %s390 = smul.addr %s389, 4
        %s391 = scalar_lea.vmem %s0, %s390
        %p392 = pneg %p58
        %p393 = pneg %p55
        %s394 = smul.u32 %s28, 8
        %s395 = ssub.s32 %s394, 1
        %p396 = scmp.gt.s32.totalorder %s395, 0
        %s397 = scalar_select %p396, %s395, 0
        %p398 = scmp.lt.s32.totalorder %s27, 1
        %s399 = scalar_select %p398, %s27, 1
        %p400 = scmp.lt.s32.totalorder %s397, 15
        %s401 = scalar_select %p400, %s397, 15
        %s402 = smul.addr %s401, 2
        %s403 = smul.addr %s399, 32
        %s404 = sadd.s32 %s402, %s403
        %s405 = smul.addr %s404, 4
        %s406 = scalar_lea.vmem %s1, %s405
        %p407 = pneg %p94
        %p408 = pneg %p91
        %s409 = smul.u32 %s28, 8
        %s410 = sadd.s32 %s409, 8
        %p411 = scmp.lt.s32.totalorder %s410, 15
        %s412 = scalar_select %p411, %s410, 15
        %p413 = scmp.lt.s32.totalorder %s27, 1
        %s414 = scalar_select %p413, %s27, 1
        %p415 = scmp.lt.s32.totalorder %s412, 15
        %s416 = scalar_select %p415, %s412, 15
        %s417 = smul.addr %s416, 2
        %s418 = smul.addr %s414, 32
        %s419 = sadd.s32 %s417, %s418
        %s420 = smul.addr %s419, 4
        %s421 = scalar_lea.vmem %s2, %s420
        %p422 = pneg %p130
        %p423 = pneg %p127
        %p424 = pneg %p151
        %p425 = pneg %p148
        %p426 = pneg %p172
        %p427 = pneg %p169
        %p428 = pneg %p193
        %p429 = pneg %p190
        %p430 = pneg %p214
        %p431 = pneg %p211
        %p432 = pneg %p235
        %p433 = pneg %p232
        %p434 = pneg %p256
        %p435 = pneg %p253
        %p436 = pneg %p284
        %p437 = pneg %p281
        %s438 = sand.u32 %s271, 1
        %s439 = scalar_lea.sflag [#allocation4], %s438
        %s440 = sand.u32 %s271, 1
        %s441 = smul.addr %s440, 64
        %s442 = scalar_lea.vmem [#allocation3], %s441
        %s443 = smul.u32 8, %s28
        %p444 = scmp.lt.s32.totalorder %s27, 1
        %s445 = scalar_select %p444, %s27, 1
        %p446 = scmp.lt.s32.totalorder %s443, 15
        %s447 = scalar_select %p446, %s443, 15
        %s448 = smul.addr %s447, 2
        %s449 = smul.addr %s445, 32
        %s450 = sadd.s32 %s448, %s449
        %s451 = smul.addr %s450, 4
        %s452 = scalar_lea.vmem %s0, %s451
        %s453 = smul.u32 8, %s28
        %s454 = smul.u32 %s28, 8
        %s455 = ssub.s32 %s454, 1
        %p456 = scmp.gt.s32.totalorder %s455, 0
        %s457 = scalar_select %p456, %s455, 0
        %p458 = scmp.lt.s32.totalorder %s27, 1
        %s459 = scalar_select %p458, %s27, 1
        %p460 = scmp.lt.s32.totalorder %s457, 15
        %s461 = scalar_select %p460, %s457, 15
        %s462 = smul.addr %s461, 2
        %s463 = smul.addr %s459, 32
        %s464 = sadd.s32 %s462, %s463
        %s465 = smul.addr %s464, 4
        %s466 = scalar_lea.vmem %s1, %s465
        %s467 = smul.u32 %s28, 8
        %s468 = ssub.s32 %s467, 1
        %p469 = scmp.gt.s32.totalorder %s468, 0
        %s470 = scalar_select %p469, %s468, 0
        %s471 = smul.u32 %s28, 8
        %s472 = sadd.s32 %s471, 8
        %p473 = scmp.lt.s32.totalorder %s472, 15
        %s474 = scalar_select %p473, %s472, 15
        %p475 = scmp.lt.s32.totalorder %s27, 1
        %s476 = scalar_select %p475, %s27, 1
        %p477 = scmp.lt.s32.totalorder %s474, 15
        %s478 = scalar_select %p477, %s474, 15
        %s479 = smul.addr %s478, 2
        %s480 = smul.addr %s476, 32
        %s481 = sadd.s32 %s479, %s480
        %s482 = smul.addr %s481, 4
        %s483 = scalar_lea.vmem %s2, %s482
        %s484 = smul.u32 %s28, 8
        %s485 = sadd.s32 %s484, 8
        %p486 = scmp.lt.s32.totalorder %s485, 15
        %s487 = scalar_select %p486, %s485, 15
        %s488 = smul.u32 8, %s28
        %v490 = vld [vmem:[%s466] sm:$0xf]
        %v491 = vld [vmem:[%s466 + $0x4] sm:$0xf]
        %v492 = vld [vmem:[%s452] sm:$0xf]
        %v493 = vld [vmem:[%s452 + $0x4] sm:$0xf]
        %v494 = vld [vmem:[%s452 + $0x8] sm:$0xf]
        %v495 = vld [vmem:[%s452 + $0xc] sm:$0xf]
        %v496 = vld [vmem:[%s452 + $0x10] sm:$0xf]
        %v497 = vld [vmem:[%s452 + $0x14] sm:$0xf]
        %v498 = vld [vmem:[%s452 + $0x18] sm:$0xf]
        %v499 = vld [vmem:[%s452 + $0x1c] sm:$0xf]
        %v500 = vld [vmem:[%s452 + $0x20] sm:$0xf]
        %v501 = vld [vmem:[%s452 + $0x24] sm:$0xf]
        %v502 = vld [vmem:[%s452 + $0x28] sm:$0xf]
        %v503 = vld [vmem:[%s452 + $0x2c] sm:$0xf]
        %v504 = vld [vmem:[%s452 + $0x30] sm:$0xf]
        %v505 = vld [vmem:[%s452 + $0x34] sm:$0xf]
        %v506 = vld [vmem:[%s452 + $0x38] sm:$0xf]
        %v507 = vld [vmem:[%s452 + $0x3c] sm:$0xf]
        %v508 = vld [vmem:[%s483] sm:$0xf]
        %v509 = vld [vmem:[%s483 + $0x4] sm:$0xf]
        %v510 = vld [vmem:[%s3] sm:$0xf]
        %v511 = vld [vmem:[%s3 + $0x4] sm:$0xf]
        %v512 = vld [vmem:[%s3 + $0x8] sm:$0xf]
        %v513 = vld [vmem:[%s3 + $0xc] sm:$0xf]
        %v514 = vld [vmem:[%s4] sm:$0x1]
        %v516 = vlaneseq
        %v517 = vshrl.u32 %v516, 7
        %v518 = vsub.s32 0, %v517
        %v519 = vrot.slane %v514, %v518
        %v541 = vunpack.c.l.b16 %v490
        %v542 = vunpack.c.l.b16 %v491
        %v543 = vunpack.c.l.b16 %v492
        %v544 = vunpack.c.l.b16 %v493
        %v545 = vunpack.c.l.b16 %v494
        %v546 = vunpack.c.l.b16 %v495
        %v547 = vunpack.c.l.b16 %v496
        %v548 = vunpack.c.l.b16 %v497
        %v549 = vunpack.c.l.b16 %v498
        %v550 = vunpack.c.l.b16 %v499
        %v551 = vunpack.c.l.b16 %v500
        %v552 = vunpack.c.l.b16 %v501
        %v553 = vunpack.c.l.b16 %v502
        %v554 = vunpack.c.l.b16 %v503
        %v555 = vunpack.c.l.b16 %v504
        %v556 = vunpack.c.l.b16 %v505
        %v557 = vunpack.c.l.b16 %v506
        %v558 = vunpack.c.l.b16 %v507
        %v559 = vunpack.c.l.b16 %v508
        %v560 = vunpack.c.l.b16 %v509
        %v561 = vpack.c.b16 %v542, %v541
        %v562 = vpack.c.b16 %v544, %v543
        %v563 = vpack.c.b16 %v546, %v545
        %v564 = vpack.c.b16 %v548, %v547
        %v565 = vpack.c.b16 %v550, %v549
        %v566 = vpack.c.b16 %v552, %v551
        %v567 = vpack.c.b16 %v554, %v553
        %v568 = vpack.c.b16 %v556, %v555
        %v569 = vpack.c.b16 %v558, %v557
        %v570 = vpack.c.b16 %v560, %v559
        %v575 = vunpack.c.l.b16 %v510
        %v576 = vunpack.c.l.b16 %v511
        %v577 = vunpack.c.l.b16 %v512
        %v578 = vunpack.c.l.b16 %v513
        %v579 = vpack.c.b16 %v576, %v575
        %v580 = vpack.c.b16 %v578, %v577
        %vm583 = vcmask 261120
        %v585 = vsel %vm583, %v561, 0
        %v588 = vsel %vm583, %v562, 0
        %v591 = vsel %vm583, %v563, 0
        %v594 = vsel %vm583, %v564, 0
        %v597 = vsel %vm583, %v565, 0
        %v600 = vsel %vm583, %v566, 0
        %v603 = vsel %vm583, %v567, 0
        %v606 = vsel %vm583, %v568, 0
        %v609 = vsel %vm583, %v569, 0
        %v612 = vsel %vm583, %v570, 0
        %614 = vmatprep.subr.bf16.mxu0 0
        %615 = vmatpush1.bf16.msra.mxu0 %v579
        %616 = vmatprep.subr.bf16.mxu0 0
        %617 = vmatpush1.bf16.msra.mxu0 %v580
        %618 = vmatprep.subr.bf16.mxu0 0
        %619 = vmatpush1.bf16.msra.mxu0 0
        %620 = vmatprep.subr.bf16.mxu0 0
        %621 = vmatpush1.bf16.msra.mxu0 0
        %622 = vmatprep.subr.bf16.mxu0 0
        %623 = vmatpush1.bf16.msra.mxu0 0
        %624 = vmatprep.subr.bf16.mxu0 0
        %625 = vmatpush1.bf16.msra.mxu0 0
        %626 = vmatprep.subr.bf16.mxu0 0
        %627 = vmatpush1.bf16.msra.mxu0 0
        %628 = vmatprep.subr.bf16.mxu0 0
        %629 = vmatpush1.bf16.msra.mxu0 0
        %630 = vmatprep.subr.bf16.mxu0 0
        %631 = vmatpush1.bf16.msra.mxu0 0
        %632 = vmatprep.subr.bf16.mxu0 0
        %633 = vmatpush1.bf16.msra.mxu0 0
        %634 = vmatprep.subr.bf16.mxu0 0
        %635 = vmatpush1.bf16.msra.mxu0 0
        %636 = vmatprep.subr.bf16.mxu0 0
        %637 = vmatpush1.bf16.msra.mxu0 0
        %638 = vmatprep.subr.bf16.mxu0 0
        %639 = vmatpush1.bf16.msra.mxu0 0
        %640 = vmatprep.subr.bf16.mxu0 0
        %641 = vmatpush1.bf16.msra.mxu0 0
        %642 = vmatprep.subr.bf16.mxu0 0
        %643 = vmatpush1.bf16.msra.mxu0 0
        %644 = vmatprep.subr.bf16.mxu0 0
        %645 = vmatpush1.bf16.msra.mxu0 0
        %646 = vmatprep.mubr.bf16.mxu0 0
        %647 = vmatmul.mubr.bf16.gmra.mrb[0].mxu0 %v585
        %v648 = vpop.f32.mrb[0].mxu0
        %v649 = vadd.f32 %v519, %v648
        %v650 = vpop.f32.mrb[0].mxu0
        %v651 = vpop.f32.mrb[0].mxu0
        %v652 = vadd.f32 %v519, %v651
        %v653 = vpop.f32.mrb[0].mxu0
        %654 = vmatprep.mubr.bf16.mxu0 0
        %655 = vmatmul.mubr.bf16.gmra.mrb[0].mxu0 %v588
        %v656 = vpop.f32.mrb[0].mxu0
        %v657 = vadd.f32 %v519, %v656
        %v658 = vpop.f32.mrb[0].mxu0
        %v659 = vpop.f32.mrb[0].mxu0
        %v660 = vadd.f32 %v519, %v659
        %v661 = vpop.f32.mrb[0].mxu0
        %662 = vmatprep.mubr.bf16.mxu0 0
        %663 = vmatmul.mubr.bf16.gmra.mrb[0].mxu0 %v591
        %v664 = vpop.f32.mrb[0].mxu0
        %v665 = vadd.f32 %v519, %v664
        %v666 = vpop.f32.mrb[0].mxu0
        %v667 = vpop.f32.mrb[0].mxu0
        %v668 = vadd.f32 %v519, %v667
        %v669 = vpop.f32.mrb[0].mxu0
        %670 = vmatprep.mubr.bf16.mxu0 0
        %671 = vmatmul.mubr.bf16.gmra.mrb[0].mxu0 %v594
        %v672 = vpop.f32.mrb[0].mxu0
        %v673 = vadd.f32 %v519, %v672
        %v674 = vpop.f32.mrb[0].mxu0
        %v675 = vpop.f32.mrb[0].mxu0
        %v676 = vadd.f32 %v519, %v675
        %v677 = vpop.f32.mrb[0].mxu0
        %678 = vmatprep.mubr.bf16.mxu0 0
        %679 = vmatmul.mubr.bf16.gmra.mrb[0].mxu0 %v597
        %v680 = vpop.f32.mrb[0].mxu0
        %v681 = vadd.f32 %v519, %v680
        %v682 = vpop.f32.mrb[0].mxu0
        %v683 = vpop.f32.mrb[0].mxu0
        %v684 = vadd.f32 %v519, %v683
        %v685 = vpop.f32.mrb[0].mxu0
        %686 = vmatprep.mubr.bf16.mxu0 0
        %687 = vmatmul.mubr.bf16.gmra.mrb[0].mxu0 %v600
        %v688 = vpop.f32.mrb[0].mxu0
        %v689 = vadd.f32 %v519, %v688
        %v690 = vpop.f32.mrb[0].mxu0
        %v691 = vpop.f32.mrb[0].mxu0
        %v692 = vadd.f32 %v519, %v691
        %v693 = vpop.f32.mrb[0].mxu0
        %694 = vmatprep.mubr.bf16.mxu0 0
        %695 = vmatmul.mubr.bf16.gmra.mrb[0].mxu0 %v603
        %v696 = vpop.f32.mrb[0].mxu0
        %v697 = vadd.f32 %v519, %v696
        %v698 = vpop.f32.mrb[0].mxu0
        %v699 = vpop.f32.mrb[0].mxu0
        %v700 = vadd.f32 %v519, %v699
        %v701 = vpop.f32.mrb[0].mxu0
        %702 = vmatprep.mubr.bf16.mxu0 0
        %703 = vmatmul.mubr.bf16.gmra.mrb[0].mxu0 %v606
        %v704 = vpop.f32.mrb[0].mxu0
        %v705 = vadd.f32 %v519, %v704
        %v706 = vpop.f32.mrb[0].mxu0
        %v707 = vpop.f32.mrb[0].mxu0
        %v708 = vadd.f32 %v519, %v707
        %v709 = vpop.f32.mrb[0].mxu0
        %710 = vmatprep.mubr.bf16.mxu0 0
        %711 = vmatmul.mubr.bf16.gmra.mrb[0].mxu0 %v609
        %v712 = vpop.f32.mrb[0].mxu0
        %v713 = vadd.f32 %v519, %v712
        %v714 = vpop.f32.mrb[0].mxu0
        %v715 = vpop.f32.mrb[0].mxu0
        %v716 = vadd.f32 %v519, %v715
        %v717 = vpop.f32.mrb[0].mxu0
        %718 = vmatprep.mubr.bf16.mxu0 0
        %719 = vmatmul.mubr.bf16.gmra.mrb[0].mxu0 %v612
        %v720 = vpop.f32.mrb[0].mxu0
        %v721 = vadd.f32 %v519, %v720
        %v722 = vpop.f32.mrb[0].mxu0
        %v723 = vpop.f32.mrb[0].mxu0
        %v724 = vadd.f32 %v519, %v723
        %v725 = vpop.f32.mrb[0].mxu0
        %726 = vdwg.mxu0
        %v727 = vmax.f32 %v649, 0.0
        %v728 = vmax.f32 %v652, 0.0
        %v729 = vmax.f32 %v657, 0.0
        %v730 = vmax.f32 %v660, 0.0
        %v731 = vmax.f32 %v665, 0.0
        %v732 = vmax.f32 %v668, 0.0
        %v733 = vmax.f32 %v673, 0.0
        %v734 = vmax.f32 %v676, 0.0
        %v735 = vmax.f32 %v681, 0.0
        %v736 = vmax.f32 %v684, 0.0
        %v737 = vmax.f32 %v689, 0.0
        %v738 = vmax.f32 %v692, 0.0
        %v739 = vmax.f32 %v697, 0.0
        %v740 = vmax.f32 %v700, 0.0
        %v741 = vmax.f32 %v705, 0.0
        %v742 = vmax.f32 %v708, 0.0
        %v743 = vmax.f32 %v713, 0.0
        %v744 = vmax.f32 %v716, 0.0
        %v745 = vmax.f32 %v721, 0.0
        %v746 = vmax.f32 %v724, 0.0
        %v747 = vpack.c.bf16 %v728, %v727
        %v748 = vpack.c.bf16 %v730, %v729
        %v749 = vpack.c.bf16 %v732, %v731
        %v750 = vpack.c.bf16 %v734, %v733
        %v751 = vpack.c.bf16 %v736, %v735
        %v752 = vpack.c.bf16 %v738, %v737
        %v753 = vpack.c.bf16 %v740, %v739
        %v754 = vpack.c.bf16 %v742, %v741
        %v755 = vpack.c.bf16 %v744, %v743
        %v756 = vpack.c.bf16 %v746, %v745
        %vm757 = vcmask 57344
        %vm758 = vsmask.f32 256
        %vm759 = vmand %vm757, %vm758
        %v760 = vld [vmem:[#allocation2] sm:$0x1]
        %v761 = vsel %vm759, 0, %v760
        %762 = vst [vmem:[#allocation2] sm:$0x1] %v761
        %v763 = vld [vmem:[#allocation2 + $0xc] sm:$0x1]
        %v764 = vsel %vm759, 0, %v763
        %765 = vst [vmem:[#allocation2 + $0xc] sm:$0x1] %v764
        %v766 = vld [vmem:[#allocation2 + $0x18] sm:$0x1]
        %v767 = vsel %vm759, 0, %v766
        %768 = vst [vmem:[#allocation2 + $0x18] sm:$0x1] %v767
        %v769 = vld [vmem:[#allocation2 + $0x24] sm:$0x1]
        %v770 = vsel %vm759, 0, %v769
        %771 = vst [vmem:[#allocation2 + $0x24] sm:$0x1] %v770
        %v772 = vld [vmem:[#allocation2 + $0x30] sm:$0x1]
        %v773 = vsel %vm759, 0, %v772
        %774 = vst [vmem:[#allocation2 + $0x30] sm:$0x1] %v773
        %v775 = vld [vmem:[#allocation2 + $0x3c] sm:$0x1]
        %v776 = vsel %vm759, 0, %v775
        %777 = vst [vmem:[#allocation2 + $0x3c] sm:$0x1] %v776
        %v778 = vld [vmem:[#allocation2 + $0x48] sm:$0x1]
        %v779 = vsel %vm759, 0, %v778
        %780 = vst [vmem:[#allocation2 + $0x48] sm:$0x1] %v779
        %v781 = vld [vmem:[#allocation2 + $0x54] sm:$0x1]
        %v782 = vsel %vm759, 0, %v781
        %783 = vst [vmem:[#allocation2 + $0x54] sm:$0x1] %v782
        %v784 = vld [vmem:[#allocation2 + $0x60] sm:$0x1]
        %v785 = vsel %vm759, 0, %v784
        %786 = vst [vmem:[#allocation2 + $0x60] sm:$0x1] %v785
        %v787 = vld [vmem:[#allocation2 + $0x6c] sm:$0x1]
        %v788 = vsel %vm759, 0, %v787
        %789 = vst [vmem:[#allocation2 + $0x6c] sm:$0x1] %v788
        %vm790 = vcmask 191619
        %vm791 = vsmask.f32 7950
        %vm792 = vmand %vm790, %vm791
        %v793 = vld [vmem:[#allocation2 + $0x4] sm:$0x8]
        %v794 = vsel %vm792, 0, %v793
        %795 = vst [vmem:[#allocation2 + $0x4] sm:$0x8] %v794
        %v796 = vld [vmem:[#allocation2 + $0x10] sm:$0x8]
        %v797 = vsel %vm792, 0, %v796
        %798 = vst [vmem:[#allocation2 + $0x10] sm:$0x8] %v797
        %v799 = vld [vmem:[#allocation2 + $0x1c] sm:$0x8]
        %v800 = vsel %vm792, 0, %v799
        %801 = vst [vmem:[#allocation2 + $0x1c] sm:$0x8] %v800
        %v802 = vld [vmem:[#allocation2 + $0x28] sm:$0x8]
        %v803 = vsel %vm792, 0, %v802
        %804 = vst [vmem:[#allocation2 + $0x28] sm:$0x8] %v803
        %v805 = vld [vmem:[#allocation2 + $0x34] sm:$0x8]
        %v806 = vsel %vm792, 0, %v805
        %807 = vst [vmem:[#allocation2 + $0x34] sm:$0x8] %v806
        %v808 = vld [vmem:[#allocation2 + $0x40] sm:$0x8]
        %v809 = vsel %vm792, 0, %v808
        %810 = vst [vmem:[#allocation2 + $0x40] sm:$0x8] %v809
        %v811 = vld [vmem:[#allocation2 + $0x4c] sm:$0x8]
        %v812 = vsel %vm792, 0, %v811
        %813 = vst [vmem:[#allocation2 + $0x4c] sm:$0x8] %v812
        %v814 = vld [vmem:[#allocation2 + $0x58] sm:$0x8]
        %v815 = vsel %vm792, 0, %v814
        %816 = vst [vmem:[#allocation2 + $0x58] sm:$0x8] %v815
        %v817 = vld [vmem:[#allocation2 + $0x64] sm:$0x8]
        %v818 = vsel %vm792, 0, %v817
        %819 = vst [vmem:[#allocation2 + $0x64] sm:$0x8] %v818
        %v820 = vld [vmem:[#allocation2 + $0x70] sm:$0x8]
        %v821 = vsel %vm792, 0, %v820
        %822 = vst [vmem:[#allocation2 + $0x70] sm:$0x8] %v821
        %vm823 = vcmask 191488
        %824 = vst.msk [vmem:[#allocation2 + $0x8] sm:$0xf] %vm823, 0
        %825 = vst.msk [vmem:[#allocation2 + $0x14] sm:$0xf] %vm823, 0
        %826 = vst.msk [vmem:[#allocation2 + $0x20] sm:$0xf] %vm823, 0
        %827 = vst.msk [vmem:[#allocation2 + $0x2c] sm:$0xf] %vm823, 0
        %828 = vst.msk [vmem:[#allocation2 + $0x38] sm:$0xf] %vm823, 0
        %829 = vst.msk [vmem:[#allocation2 + $0x44] sm:$0xf] %vm823, 0
        %830 = vst.msk [vmem:[#allocation2 + $0x50] sm:$0xf] %vm823, 0
        %831 = vst.msk [vmem:[#allocation2 + $0x5c] sm:$0xf] %vm823, 0
        %832 = vst.msk [vmem:[#allocation2 + $0x68] sm:$0xf] %vm823, 0
        %833 = vst.msk [vmem:[#allocation2 + $0x74] sm:$0xf] %vm823, 0
        %v844 = vunpack.c.l.b16 %v747
        %v845 = vunpack.c.h.b16 %v747
        %v846 = vunpack.c.l.b16 %v748
        %v847 = vunpack.c.h.b16 %v748
        %v848 = vunpack.c.l.b16 %v749
        %v849 = vunpack.c.h.b16 %v749
        %v850 = vunpack.c.l.b16 %v750
        %v851 = vunpack.c.h.b16 %v750
        %v852 = vunpack.c.l.b16 %v751
        %v853 = vunpack.c.h.b16 %v751
        %v854 = vunpack.c.l.b16 %v752
        %v855 = vunpack.c.h.b16 %v752
        %v856 = vunpack.c.l.b16 %v753
        %v857 = vunpack.c.h.b16 %v753
        %v858 = vunpack.c.l.b16 %v754
        %v859 = vunpack.c.h.b16 %v754
        %v860 = vunpack.c.l.b16 %v755
        %v861 = vunpack.c.h.b16 %v755
        %v862 = vunpack.c.l.b16 %v756
        %v863 = vunpack.c.h.b16 %v756
        %v864 = vpack.c.b16 %v844, %v844
        %v865 = vpack.c.b16 %v845, %v845
        %v866 = vpack.c.b16 %v846, %v846
        %v867 = vpack.c.b16 %v847, %v847
        %v868 = vpack.c.b16 %v848, %v848
        %v869 = vpack.c.b16 %v849, %v849
        %v870 = vpack.c.b16 %v850, %v850
        %v871 = vpack.c.b16 %v851, %v851
        %v872 = vpack.c.b16 %v852, %v852
        %v873 = vpack.c.b16 %v853, %v853
        %v874 = vpack.c.b16 %v854, %v854
        %v875 = vpack.c.b16 %v855, %v855
        %v876 = vpack.c.b16 %v856, %v856
        %v877 = vpack.c.b16 %v857, %v857
        %v878 = vpack.c.b16 %v858, %v858
        %v879 = vpack.c.b16 %v859, %v859
        %v880 = vpack.c.b16 %v860, %v860
        %v881 = vpack.c.b16 %v861, %v861
        %v882 = vpack.c.b16 %v862, %v862
        %v883 = vpack.c.b16 %v863, %v863
        %vm884 = vsmask.f32 4368
        %vm885 = vmor %vm758, %vm884
        %v887 = vshrl.u32 %v864, 16
        %v889 = vrot.slane %v887, 7
        %v890 = vshll.u32 %v864, 16
        %v892 = vor.u32 %v889, %v890
        %v893 = vrot.slane %v889, 4
        %v895 = vshrl.u32 %v865, 16
        %v897 = vrot.slane %v895, 7
        %v898 = vshll.u32 %v865, 16
        %v900 = vor.u32 %v897, %v898
        %v901 = vsel %vm885, %v893, %v900
        %v902 = vrot.slane %v897, 4
        %v904 = vshrl.u32 %v866, 16
        %v906 = vrot.slane %v904, 7
        %v907 = vshll.u32 %v866, 16
        %v909 = vor.u32 %v906, %v907
        %v910 = vrot.slane %v906, 4
        %v912 = vshrl.u32 %v867, 16
        %v914 = vrot.slane %v912, 7
        %v915 = vshll.u32 %v867, 16
        %v917 = vor.u32 %v914, %v915
        %v918 = vsel %vm885, %v910, %v917
        %v919 = vrot.slane %v914, 4
        %v921 = vshrl.u32 %v868, 16
        %v923 = vrot.slane %v921, 7
        %v924 = vshll.u32 %v868, 16
        %v926 = vor.u32 %v923, %v924
        %v927 = vrot.slane %v923, 4
        %v929 = vshrl.u32 %v869, 16
        %v931 = vrot.slane %v929, 7
        %v932 = vshll.u32 %v869, 16
        %v934 = vor.u32 %v931, %v932
        %v935 = vsel %vm885, %v927, %v934
        %v936 = vrot.slane %v931, 4
        %v938 = vshrl.u32 %v870, 16
        %v940 = vrot.slane %v938, 7
        %v941 = vshll.u32 %v870, 16
        %v943 = vor.u32 %v940, %v941
        %v944 = vrot.slane %v940, 4
        %v946 = vshrl.u32 %v871, 16
        %v948 = vrot.slane %v946, 7
        %v949 = vshll.u32 %v871, 16
        %v951 = vor.u32 %v948, %v949
        %v952 = vsel %vm885, %v944, %v951
        %v953 = vrot.slane %v948, 4
        %v955 = vshrl.u32 %v872, 16
        %v957 = vrot.slane %v955, 7
        %v958 = vshll.u32 %v872, 16
        %v960 = vor.u32 %v957, %v958
        %v961 = vrot.slane %v957, 4
        %v963 = vshrl.u32 %v873, 16
        %v965 = vrot.slane %v963, 7
        %v966 = vshll.u32 %v873, 16
        %v968 = vor.u32 %v965, %v966
        %v969 = vsel %vm885, %v961, %v968
        %v970 = vrot.slane %v965, 4
        %v972 = vshrl.u32 %v874, 16
        %v974 = vrot.slane %v972, 7
        %v975 = vshll.u32 %v874, 16
        %v977 = vor.u32 %v974, %v975
        %v978 = vrot.slane %v974, 4
        %v980 = vshrl.u32 %v875, 16
        %v982 = vrot.slane %v980, 7
        %v983 = vshll.u32 %v875, 16
        %v985 = vor.u32 %v982, %v983
        %v986 = vsel %vm885, %v978, %v985
        %v987 = vrot.slane %v982, 4
        %v989 = vshrl.u32 %v876, 16
        %v991 = vrot.slane %v989, 7
        %v992 = vshll.u32 %v876, 16
        %v994 = vor.u32 %v991, %v992
        %v995 = vrot.slane %v991, 4
        %v997 = vshrl.u32 %v877, 16
        %v999 = vrot.slane %v997, 7
        %v1000 = vshll.u32 %v877, 16
        %v1002 = vor.u32 %v999, %v1000
        %v1003 = vsel %vm885, %v995, %v1002
        %v1004 = vrot.slane %v999, 4
        %v1006 = vshrl.u32 %v878, 16
        %v1008 = vrot.slane %v1006, 7
        %v1009 = vshll.u32 %v878, 16
        %v1011 = vor.u32 %v1008, %v1009
        %v1012 = vrot.slane %v1008, 4
        %v1014 = vshrl.u32 %v879, 16
        %v1016 = vrot.slane %v1014, 7
        %v1017 = vshll.u32 %v879, 16
        %v1019 = vor.u32 %v1016, %v1017
        %v1020 = vsel %vm885, %v1012, %v1019
        %v1021 = vrot.slane %v1016, 4
        %v1023 = vshrl.u32 %v880, 16
        %v1025 = vrot.slane %v1023, 7
        %v1026 = vshll.u32 %v880, 16
        %v1028 = vor.u32 %v1025, %v1026
        %v1029 = vrot.slane %v1025, 4
        %v1031 = vshrl.u32 %v881, 16
        %v1033 = vrot.slane %v1031, 7
        %v1034 = vshll.u32 %v881, 16
        %v1036 = vor.u32 %v1033, %v1034
        %v1037 = vsel %vm885, %v1029, %v1036
        %v1038 = vrot.slane %v1033, 4
        %v1040 = vshrl.u32 %v882, 16
        %v1042 = vrot.slane %v1040, 7
        %v1043 = vshll.u32 %v882, 16
        %v1045 = vor.u32 %v1042, %v1043
        %v1046 = vrot.slane %v1042, 4
        %v1048 = vshrl.u32 %v883, 16
        %v1050 = vrot.slane %v1048, 7
        %v1051 = vshll.u32 %v883, 16
        %v1053 = vor.u32 %v1050, %v1051
        %v1054 = vsel %vm885, %v1046, %v1053
        %v1055 = vrot.slane %v1050, 4
        %vm1086 = vcmask 60416
        %vm1087 = vsmask.f32 7938
        %vm1088 = vmand %vm1086, %vm1087
        %v1089 = vld [vmem:[#allocation2] sm:$0xf]
        %v1090 = vsel %vm1088, %v892, %v1089
        %1091 = vst [vmem:[#allocation2] sm:$0xf] %v1090
        %vm1092 = vcmask 60416
        %1093 = vst.msk [vmem:[#allocation2 + $0x4] sm:$0xf] %vm1092, %v901
        %v1094 = vld [vmem:[#allocation2 + $0x8] sm:$0x1]
        %v1095 = vsel %vm759, %v902, %v1094
        %1096 = vst [vmem:[#allocation2 + $0x8] sm:$0x1] %v1095
        %v1097 = vld [vmem:[#allocation2 + $0xc] sm:$0xf]
        %v1098 = vsel %vm1088, %v909, %v1097
        %1099 = vst [vmem:[#allocation2 + $0xc] sm:$0xf] %v1098
        %1100 = vst.msk [vmem:[#allocation2 + $0x10] sm:$0xf] %vm1092, %v918
        %v1101 = vld [vmem:[#allocation2 + $0x14] sm:$0x1]
        %v1102 = vsel %vm759, %v919, %v1101
        %1103 = vst [vmem:[#allocation2 + $0x14] sm:$0x1] %v1102
        %v1104 = vld [vmem:[#allocation2 + $0x18] sm:$0xf]
        %v1105 = vsel %vm1088, %v926, %v1104
        %1106 = vst [vmem:[#allocation2 + $0x18] sm:$0xf] %v1105
        %1107 = vst.msk [vmem:[#allocation2 + $0x1c] sm:$0xf] %vm1092, %v935
        %v1108 = vld [vmem:[#allocation2 + $0x20] sm:$0x1]
        %v1109 = vsel %vm759, %v936, %v1108
        %1110 = vst [vmem:[#allocation2 + $0x20] sm:$0x1] %v1109
        %v1111 = vld [vmem:[#allocation2 + $0x24] sm:$0xf]
        %v1112 = vsel %vm1088, %v943, %v1111
        %1113 = vst [vmem:[#allocation2 + $0x24] sm:$0xf] %v1112
        %1114 = vst.msk [vmem:[#allocation2 + $0x28] sm:$0xf] %vm1092, %v952
        %v1115 = vld [vmem:[#allocation2 + $0x2c] sm:$0x1]
        %v1116 = vsel %vm759, %v953, %v1115
        %1117 = vst [vmem:[#allocation2 + $0x2c] sm:$0x1] %v1116
        %v1118 = vld [vmem:[#allocation2 + $0x30] sm:$0xf]
        %v1119 = vsel %vm1088, %v960, %v1118
        %1120 = vst [vmem:[#allocation2 + $0x30] sm:$0xf] %v1119
        %1121 = vst.msk [vmem:[#allocation2 + $0x34] sm:$0xf] %vm1092, %v969
        %v1122 = vld [vmem:[#allocation2 + $0x38] sm:$0x1]
        %v1123 = vsel %vm759, %v970, %v1122
        %1124 = vst [vmem:[#allocation2 + $0x38] sm:$0x1] %v1123
        %v1125 = vld [vmem:[#allocation2 + $0x3c] sm:$0xf]
        %v1126 = vsel %vm1088, %v977, %v1125
        %1127 = vst [vmem:[#allocation2 + $0x3c] sm:$0xf] %v1126
        %1128 = vst.msk [vmem:[#allocation2 + $0x40] sm:$0xf] %vm1092, %v986
        %v1129 = vld [vmem:[#allocation2 + $0x44] sm:$0x1]
        %v1130 = vsel %vm759, %v987, %v1129
        %1131 = vst [vmem:[#allocation2 + $0x44] sm:$0x1] %v1130
        %v1132 = vld [vmem:[#allocation2 + $0x48] sm:$0xf]
        %v1133 = vsel %vm1088, %v994, %v1132
        %1134 = vst [vmem:[#allocation2 + $0x48] sm:$0xf] %v1133
        %1135 = vst.msk [vmem:[#allocation2 + $0x4c] sm:$0xf] %vm1092, %v1003
        %v1136 = vld [vmem:[#allocation2 + $0x50] sm:$0x1]
        %v1137 = vsel %vm759, %v1004, %v1136
        %1138 = vst [vmem:[#allocation2 + $0x50] sm:$0x1] %v1137
        %v1139 = vld [vmem:[#allocation2 + $0x54] sm:$0xf]
        %v1140 = vsel %vm1088, %v1011, %v1139
        %1141 = vst [vmem:[#allocation2 + $0x54] sm:$0xf] %v1140
        %1142 = vst.msk [vmem:[#allocation2 + $0x58] sm:$0xf] %vm1092, %v1020
        %v1143 = vld [vmem:[#allocation2 + $0x5c] sm:$0x1]
        %v1144 = vsel %vm759, %v1021, %v1143
        %1145 = vst [vmem:[#allocation2 + $0x5c] sm:$0x1] %v1144
        %v1146 = vld [vmem:[#allocation2 + $0x60] sm:$0xf]
        %v1147 = vsel %vm1088, %v1028, %v1146
        %1148 = vst [vmem:[#allocation2 + $0x60] sm:$0xf] %v1147
        %1149 = vst.msk [vmem:[#allocation2 + $0x64] sm:$0xf] %vm1092, %v1037
        %v1150 = vld [vmem:[#allocation2 + $0x68] sm:$0x1]
        %v1151 = vsel %vm759, %v1038, %v1150
        %1152 = vst [vmem:[#allocation2 + $0x68] sm:$0x1] %v1151
        %v1153 = vld [vmem:[#allocation2 + $0x6c] sm:$0xf]
        %v1154 = vsel %vm1088, %v1045, %v1153
        %1155 = vst [vmem:[#allocation2 + $0x6c] sm:$0xf] %v1154
        %1156 = vst.msk [vmem:[#allocation2 + $0x70] sm:$0xf] %vm1092, %v1054
        %v1157 = vld [vmem:[#allocation2 + $0x74] sm:$0x1]
        %v1158 = vsel %vm759, %v1055, %v1157
        %1159 = vst [vmem:[#allocation2 + $0x74] sm:$0x1] %v1158
        %1160 = vrot.lane.b32.xlu0 %v864, 8
        %v1161 = vpop.permute.xlu0 %1160
        %1162 = vrot.lane.b32.xlu0 %v865, 8
        %v1163 = vpop.permute.xlu0 %1162
        %1164 = vrot.lane.b32.xlu0 %v866, 8
        %v1165 = vpop.permute.xlu0 %1164
        %1166 = vrot.lane.b32.xlu0 %v867, 8
        %v1167 = vpop.permute.xlu0 %1166
        %1168 = vrot.lane.b32.xlu0 %v868, 8
        %v1169 = vpop.permute.xlu0 %1168
        %1170 = vrot.lane.b32.xlu0 %v869, 8
        %v1171 = vpop.permute.xlu0 %1170
        %1172 = vrot.lane.b32.xlu0 %v870, 8
        %v1173 = vpop.permute.xlu0 %1172
        %1174 = vrot.lane.b32.xlu0 %v871, 8
        %v1175 = vpop.permute.xlu0 %1174
        %1176 = vrot.lane.b32.xlu0 %v872, 8
        %v1177 = vpop.permute.xlu0 %1176
        %1178 = vrot.lane.b32.xlu0 %v873, 8
        %v1179 = vpop.permute.xlu0 %1178
        %1180 = vrot.lane.b32.xlu0 %v874, 8
        %v1181 = vpop.permute.xlu0 %1180
        %1182 = vrot.lane.b32.xlu0 %v875, 8
        %v1183 = vpop.permute.xlu0 %1182
        %1184 = vrot.lane.b32.xlu0 %v876, 8
        %v1185 = vpop.permute.xlu0 %1184
        %1186 = vrot.lane.b32.xlu0 %v877, 8
        %v1187 = vpop.permute.xlu0 %1186
        %1188 = vrot.lane.b32.xlu0 %v878, 8
        %v1189 = vpop.permute.xlu0 %1188
        %1190 = vrot.lane.b32.xlu0 %v879, 8
        %v1191 = vpop.permute.xlu0 %1190
        %1192 = vrot.lane.b32.xlu0 %v880, 8
        %v1193 = vpop.permute.xlu0 %1192
        %1194 = vrot.lane.b32.xlu0 %v881, 8
        %v1195 = vpop.permute.xlu0 %1194
        %1196 = vrot.lane.b32.xlu0 %v882, 8
        %v1197 = vpop.permute.xlu0 %1196
        %1198 = vrot.lane.b32.xlu0 %v883, 8
        %v1199 = vpop.permute.xlu0 %1198
        %vm1220 = vcmask 126016
        %1221 = vst.msk [vmem:[#allocation2] sm:$0xf] %vm1220, %v1161
        %1222 = vst.msk [vmem:[#allocation2 + $0x4] sm:$0xf] %vm1220, %v1163
        %1223 = vst.msk [vmem:[#allocation2 + $0xc] sm:$0xf] %vm1220, %v1165
        %1224 = vst.msk [vmem:[#allocation2 + $0x10] sm:$0xf] %vm1220, %v1167
        %1225 = vst.msk [vmem:[#allocation2 + $0x18] sm:$0xf] %vm1220, %v1169
        %1226 = vst.msk [vmem:[#allocation2 + $0x1c] sm:$0xf] %vm1220, %v1171
        %1227 = vst.msk [vmem:[#allocation2 + $0x24] sm:$0xf] %vm1220, %v1173
        %1228 = vst.msk [vmem:[#allocation2 + $0x28] sm:$0xf] %vm1220, %v1175
        %1229 = vst.msk [vmem:[#allocation2 + $0x30] sm:$0xf] %vm1220, %v1177
        %1230 = vst.msk [vmem:[#allocation2 + $0x34] sm:$0xf] %vm1220, %v1179
        %1231 = vst.msk [vmem:[#allocation2 + $0x3c] sm:$0xf] %vm1220, %v1181
        %1232 = vst.msk [vmem:[#allocation2 + $0x40] sm:$0xf] %vm1220, %v1183
        %1233 = vst.msk [vmem:[#allocation2 + $0x48] sm:$0xf] %vm1220, %v1185
        %1234 = vst.msk [vmem:[#allocation2 + $0x4c] sm:$0xf] %vm1220, %v1187
        %1235 = vst.msk [vmem:[#allocation2 + $0x54] sm:$0xf] %vm1220, %v1189
        %1236 = vst.msk [vmem:[#allocation2 + $0x58] sm:$0xf] %vm1220, %v1191
        %1237 = vst.msk [vmem:[#allocation2 + $0x60] sm:$0xf] %vm1220, %v1193
        %1238 = vst.msk [vmem:[#allocation2 + $0x64] sm:$0xf] %vm1220, %v1195
        %1239 = vst.msk [vmem:[#allocation2 + $0x6c] sm:$0xf] %vm1220, %v1197
        %1240 = vst.msk [vmem:[#allocation2 + $0x70] sm:$0xf] %vm1220, %v1199
        %vm1241 = vsmask.f32 3328
        %vm1242 = vsmask.f32 7440
        %vm1243 = vmor %vm1241, %vm1242
        %v1244 = vrot.slane %v887, 4
        %v1245 = vrot.slane %v890, 5
        %v1246 = vor.u32 %v1244, %v1245
        %v1247 = vrot.slane %v1246, 4
        %v1248 = vrot.slane %v898, 5
        %v1249 = vsel %vm1243, %v1247, %v1248
        %v1250 = vrot.slane %v895, 4
        %v1251 = vor.u32 %v1250, %v1248
        %v1252 = vrot.slane %v1251, 4
        %v1253 = vrot.slane %v904, 4
        %v1254 = vrot.slane %v907, 5
        %v1255 = vor.u32 %v1253, %v1254
        %v1256 = vrot.slane %v1255, 4
        %v1257 = vrot.slane %v915, 5
        %v1258 = vsel %vm1243, %v1256, %v1257
        %v1259 = vrot.slane %v912, 4
        %v1260 = vor.u32 %v1259, %v1257
        %v1261 = vrot.slane %v1260, 4
        %v1262 = vrot.slane %v921, 4
        %v1263 = vrot.slane %v924, 5
        %v1264 = vor.u32 %v1262, %v1263
        %v1265 = vrot.slane %v1264, 4
        %v1266 = vrot.slane %v932, 5
        %v1267 = vsel %vm1243, %v1265, %v1266
        %v1268 = vrot.slane %v929, 4
        %v1269 = vor.u32 %v1268, %v1266
        %v1270 = vrot.slane %v1269, 4
        %v1271 = vrot.slane %v938, 4
        %v1272 = vrot.slane %v941, 5
        %v1273 = vor.u32 %v1271, %v1272
        %v1274 = vrot.slane %v1273, 4
        %v1275 = vrot.slane %v949, 5
        %v1276 = vsel %vm1243, %v1274, %v1275
        %v1277 = vrot.slane %v946, 4
        %v1278 = vor.u32 %v1277, %v1275
        %v1279 = vrot.slane %v1278, 4
        %v1280 = vrot.slane %v955, 4
        %v1281 = vrot.slane %v958, 5
        %v1282 = vor.u32 %v1280, %v1281
        %v1283 = vrot.slane %v1282, 4
        %v1284 = vrot.slane %v966, 5
        %v1285 = vsel %vm1243, %v1283, %v1284
        %v1286 = vrot.slane %v963, 4
        %v1287 = vor.u32 %v1286, %v1284
        %v1288 = vrot.slane %v1287, 4
        %v1289 = vrot.slane %v972, 4
        %v1290 = vrot.slane %v975, 5
        %v1291 = vor.u32 %v1289, %v1290
        %v1292 = vrot.slane %v1291, 4
        %v1293 = vrot.slane %v983, 5
        %v1294 = vsel %vm1243, %v1292, %v1293
        %v1295 = vrot.slane %v980, 4
        %v1296 = vor.u32 %v1295, %v1293
        %v1297 = vrot.slane %v1296, 4
        %v1298 = vrot.slane %v989, 4
        %v1299 = vrot.slane %v992, 5
        %v1300 = vor.u32 %v1298, %v1299
        %v1301 = vrot.slane %v1300, 4
        %v1302 = vrot.slane %v1000, 5
        %v1303 = vsel %vm1243, %v1301, %v1302
        %v1304 = vrot.slane %v997, 4
        %v1305 = vor.u32 %v1304, %v1302
        %v1306 = vrot.slane %v1305, 4
        %v1307 = vrot.slane %v1006, 4
        %v1308 = vrot.slane %v1009, 5
        %v1309 = vor.u32 %v1307, %v1308
        %v1310 = vrot.slane %v1309, 4
        %v1311 = vrot.slane %v1017, 5
        %v1312 = vsel %vm1243, %v1310, %v1311
        %v1313 = vrot.slane %v1014, 4
        %v1314 = vor.u32 %v1313, %v1311
        %v1315 = vrot.slane %v1314, 4
        %v1316 = vrot.slane %v1023, 4
        %v1317 = vrot.slane %v1026, 5
        %v1318 = vor.u32 %v1316, %v1317
        %v1319 = vrot.slane %v1318, 4
        %v1320 = vrot.slane %v1034, 5
        %v1321 = vsel %vm1243, %v1319, %v1320
        %v1322 = vrot.slane %v1031, 4
        %v1323 = vor.u32 %v1322, %v1320
        %v1324 = vrot.slane %v1323, 4
        %v1325 = vrot.slane %v1040, 4
        %v1326 = vrot.slane %v1043, 5
        %v1327 = vor.u32 %v1325, %v1326
        %v1328 = vrot.slane %v1327, 4
        %v1329 = vrot.slane %v1051, 5
        %v1330 = vsel %vm1243, %v1328, %v1329
        %v1331 = vrot.slane %v1048, 4
        %v1332 = vor.u32 %v1331, %v1329
        %v1333 = vrot.slane %v1332, 4
        %1334 = vrot.lane.b32.xlu0 %v1249, 16
        %v1335 = vpop.permute.xlu0 %1334
        %1336 = vrot.lane.b32.xlu0 %v1252, 16
        %v1337 = vpop.permute.xlu0 %1336
        %1338 = vrot.lane.b32.xlu0 %v1258, 16
        %v1339 = vpop.permute.xlu0 %1338
        %1340 = vrot.lane.b32.xlu0 %v1261, 16
        %v1341 = vpop.permute.xlu0 %1340
        %1342 = vrot.lane.b32.xlu0 %v1267, 16
        %v1343 = vpop.permute.xlu0 %1342
        %1344 = vrot.lane.b32.xlu0 %v1270, 16
        %v1345 = vpop.permute.xlu0 %1344
        %1346 = vrot.lane.b32.xlu0 %v1276, 16
        %v1347 = vpop.permute.xlu0 %1346
        %1348 = vrot.lane.b32.xlu0 %v1279, 16
        %v1349 = vpop.permute.xlu0 %1348
        %1350 = vrot.lane.b32.xlu0 %v1285, 16
        %v1351 = vpop.permute.xlu0 %1350
        %1352 = vrot.lane.b32.xlu0 %v1288, 16
        %v1353 = vpop.permute.xlu0 %1352
        %1354 = vrot.lane.b32.xlu0 %v1294, 16
        %v1355 = vpop.permute.xlu0 %1354
        %1356 = vrot.lane.b32.xlu0 %v1297, 16
        %v1357 = vpop.permute.xlu0 %1356
        %1358 = vrot.lane.b32.xlu0 %v1303, 16
        %v1359 = vpop.permute.xlu0 %1358
        %1360 = vrot.lane.b32.xlu0 %v1306, 16
        %v1361 = vpop.permute.xlu0 %1360
        %1362 = vrot.lane.b32.xlu0 %v1312, 16
        %v1363 = vpop.permute.xlu0 %1362
        %1364 = vrot.lane.b32.xlu0 %v1315, 16
        %v1365 = vpop.permute.xlu0 %1364
        %1366 = vrot.lane.b32.xlu0 %v1321, 16
        %v1367 = vpop.permute.xlu0 %1366
        %1368 = vrot.lane.b32.xlu0 %v1324, 16
        %v1369 = vpop.permute.xlu0 %1368
        %1370 = vrot.lane.b32.xlu0 %v1330, 16
        %v1371 = vpop.permute.xlu0 %1370
        %1372 = vrot.lane.b32.xlu0 %v1333, 16
        %v1373 = vpop.permute.xlu0 %1372
        %vm1394 = vcmask 191616
        %1395 = vst.msk [vmem:[#allocation2] sm:$0xf] %vm1394, %v1335
        %vm1396 = vcmask 191616
        %vm1397 = vmand %vm1396, %vm1241
        %v1398 = vld [vmem:[#allocation2 + $0x4] sm:$0xf]
        %v1399 = vsel %vm1397, %v1337, %v1398
        %1400 = vst [vmem:[#allocation2 + $0x4] sm:$0xf] %v1399
        %1401 = vst.msk [vmem:[#allocation2 + $0xc] sm:$0xf] %vm1394, %v1339
        %v1402 = vld [vmem:[#allocation2 + $0x10] sm:$0xf]
        %v1403 = vsel %vm1397, %v1341, %v1402
        %1404 = vst [vmem:[#allocation2 + $0x10] sm:$0xf] %v1403
        %1405 = vst.msk [vmem:[#allocation2 + $0x18] sm:$0xf] %vm1394, %v1343
        %v1406 = vld [vmem:[#allocation2 + $0x1c] sm:$0xf]
        %v1407 = vsel %vm1397, %v1345, %v1406
        %1408 = vst [vmem:[#allocation2 + $0x1c] sm:$0xf] %v1407
        %1409 = vst.msk [vmem:[#allocation2 + $0x24] sm:$0xf] %vm1394, %v1347
        %v1410 = vld [vmem:[#allocation2 + $0x28] sm:$0xf]
        %v1411 = vsel %vm1397, %v1349, %v1410
        %1412 = vst [vmem:[#allocation2 + $0x28] sm:$0xf] %v1411
        %1413 = vst.msk [vmem:[#allocation2 + $0x30] sm:$0xf] %vm1394, %v1351
        %v1414 = vld [vmem:[#allocation2 + $0x34] sm:$0xf]
        %v1415 = vsel %vm1397, %v1353, %v1414
        %1416 = vst [vmem:[#allocation2 + $0x34] sm:$0xf] %v1415
        %1417 = vst.msk [vmem:[#allocation2 + $0x3c] sm:$0xf] %vm1394, %v1355
        %v1418 = vld [vmem:[#allocation2 + $0x40] sm:$0xf]
        %v1419 = vsel %vm1397, %v1357, %v1418
        %1420 = vst [vmem:[#allocation2 + $0x40] sm:$0xf] %v1419
        %1421 = vst.msk [vmem:[#allocation2 + $0x48] sm:$0xf] %vm1394, %v1359
        %v1422 = vld [vmem:[#allocation2 + $0x4c] sm:$0xf]
        %v1423 = vsel %vm1397, %v1361, %v1422
        %1424 = vst [vmem:[#allocation2 + $0x4c] sm:$0xf] %v1423
        %1425 = vst.msk [vmem:[#allocation2 + $0x54] sm:$0xf] %vm1394, %v1363
        %v1426 = vld [vmem:[#allocation2 + $0x58] sm:$0xf]
        %v1427 = vsel %vm1397, %v1365, %v1426
        %1428 = vst [vmem:[#allocation2 + $0x58] sm:$0xf] %v1427
        %1429 = vst.msk [vmem:[#allocation2 + $0x60] sm:$0xf] %vm1394, %v1367
        %v1430 = vld [vmem:[#allocation2 + $0x64] sm:$0xf]
        %v1431 = vsel %vm1397, %v1369, %v1430
        %1432 = vst [vmem:[#allocation2 + $0x64] sm:$0xf] %v1431
        %1433 = vst.msk [vmem:[#allocation2 + $0x6c] sm:$0xf] %vm1394, %v1371
        %v1434 = vld [vmem:[#allocation2 + $0x70] sm:$0xf]
        %v1435 = vsel %vm1397, %v1373, %v1434
        %1436 = vst [vmem:[#allocation2 + $0x70] sm:$0xf] %v1435
        %p1437 = scmp.eq.s32.totalorder %s28, 0
        // Predicated region
        $region57: #{bottleneck_forward_nhwc.1} parent=55 // pred_check
          %p1438 = pneg %p1437
        $region58: #{bottleneck_forward_nhwc.1} parent=55 // pred_check_branch
          %1440 = sbr.rel (%p1438) target = $region60
        $region59: #{bottleneck_forward_nhwc.1} parent=55 // pred_region
          %1441 = vst.msk [vmem:[#allocation2] sm:$0xf] %vm823, 0
          %1442 = vst.msk [vmem:[#allocation2 + $0x4] sm:$0xf] %vm823, 0
          %1443 = vst.msk [vmem:[#allocation2 + $0x8] sm:$0xf] %vm823, 0
        $region60: #{bottleneck_forward_nhwc.1} parent=55 // pred_fallthru
          _
        %p1444 = scmp.eq.s32.totalorder %s28, 1
        // Predicated region
        $region61: #{bottleneck_forward_nhwc.1} parent=55 // pred_check
          %p1445 = pneg %p1444
        $region62: #{bottleneck_forward_nhwc.1} parent=55 // pred_check_branch
          %1447 = sbr.rel (%p1445) target = $region64
        $region63: #{bottleneck_forward_nhwc.1} parent=55 // pred_region
          %s1448 = scalar_lea.vmem [#allocation2], 108
          %1449 = vst.msk [vmem:[%s1448] sm:$0xf] %vm823, 0
          %1450 = vst.msk [vmem:[%s1448 + $0x4] sm:$0xf] %vm823, 0
          %1451 = vst.msk [vmem:[%s1448 + $0x8] sm:$0xf] %vm823, 0
        $region64: #{bottleneck_forward_nhwc.1} parent=55 // pred_fallthru
          _
        %v1452 = vld [vmem:[#allocation2] sm:$0xf]
        %v1453 = vld [vmem:[#allocation2 + $0x4] sm:$0xf]
        %v1454 = vld [vmem:[#allocation2 + $0x8] sm:$0xf]
        %v1455 = vld [vmem:[#allocation2 + $0xc] sm:$0xf]
        %v1456 = vld [vmem:[#allocation2 + $0x10] sm:$0xf]
        %v1457 = vld [vmem:[#allocation2 + $0x14] sm:$0xf]
        %v1458 = vld [vmem:[#allocation2 + $0x18] sm:$0xf]
        %v1459 = vld [vmem:[#allocation2 + $0x1c] sm:$0xf]
        %v1460 = vld [vmem:[#allocation2 + $0x20] sm:$0xf]
        %v1461 = vld [vmem:[#allocation2 + $0x24] sm:$0xf]
        %v1462 = vld [vmem:[#allocation2 + $0x28] sm:$0xf]
        %v1463 = vld [vmem:[#allocation2 + $0x2c] sm:$0xf]
        %v1464 = vld [vmem:[#allocation2 + $0x30] sm:$0xf]
        %v1465 = vld [vmem:[#allocation2 + $0x34] sm:$0xf]
        %v1466 = vld [vmem:[#allocation2 + $0x38] sm:$0xf]
        %v1467 = vld [vmem:[#allocation2 + $0x3c] sm:$0xf]
        %v1468 = vld [vmem:[#allocation2 + $0x40] sm:$0xf]
        %v1469 = vld [vmem:[#allocation2 + $0x44] sm:$0xf]
        %v1470 = vld [vmem:[#allocation2 + $0x48] sm:$0xf]
        %v1471 = vld [vmem:[#allocation2 + $0x4c] sm:$0xf]
        %v1472 = vld [vmem:[#allocation2 + $0x50] sm:$0xf]
        %v1473 = vld [vmem:[#allocation2 + $0x54] sm:$0xf]
        %v1474 = vld [vmem:[#allocation2 + $0x58] sm:$0xf]
        %v1475 = vld [vmem:[#allocation2 + $0x5c] sm:$0xf]
        %v1476 = vld [vmem:[%s5] sm:$0xf]
        %v1477 = vld [vmem:[%s5 + $0x4] sm:$0xf]
        %v1478 = vld [vmem:[%s5 + $0x8] sm:$0xf]
        %s1479 = scalar_lea.vmem [#allocation2], 12
        %v1480 = vld [vmem:[%s1479] sm:$0xf]
        %v1481 = vld [vmem:[%s1479 + $0x4] sm:$0xf]
        %v1482 = vld [vmem:[%s1479 + $0x8] sm:$0xf]
        %v1483 = vld [vmem:[%s1479 + $0xc] sm:$0xf]
        %v1484 = vld [vmem:[%s1479 + $0x10] sm:$0xf]
        %v1485 = vld [vmem:[%s1479 + $0x14] sm:$0xf]
        %v1486 = vld [vmem:[%s1479 + $0x18] sm:$0xf]
        %v1487 = vld [vmem:[%s1479 + $0x1c] sm:$0xf]
        %v1488 = vld [vmem:[%s1479 + $0x20] sm:$0xf]
        %v1489 = vld [vmem:[%s1479 + $0x24] sm:$0xf]
        %v1490 = vld [vmem:[%s1479 + $0x28] sm:$0xf]
        %v1491 = vld [vmem:[%s1479 + $0x2c] sm:$0xf]
        %v1492 = vld [vmem:[%s1479 + $0x30] sm:$0xf]
        %v1493 = vld [vmem:[%s1479 + $0x34] sm:$0xf]
        %v1494 = vld [vmem:[%s1479 + $0x38] sm:$0xf]
        %v1495 = vld [vmem:[%s1479 + $0x3c] sm:$0xf]
        %v1496 = vld [vmem:[%s1479 + $0x40] sm:$0xf]
        %v1497 = vld [vmem:[%s1479 + $0x44] sm:$0xf]
        %v1498 = vld [vmem:[%s1479 + $0x48] sm:$0xf]
        %v1499 = vld [vmem:[%s1479 + $0x4c] sm:$0xf]
        %v1500 = vld [vmem:[%s1479 + $0x50] sm:$0xf]
        %v1501 = vld [vmem:[%s1479 + $0x54] sm:$0xf]
        %v1502 = vld [vmem:[%s1479 + $0x58] sm:$0xf]
        %v1503 = vld [vmem:[%s1479 + $0x5c] sm:$0xf]
        %s1504 = scalar_lea.vmem %s5, 12
        %v1505 = vld [vmem:[%s1504] sm:$0xf]
        %v1506 = vld [vmem:[%s1504 + $0x4] sm:$0xf]
        %v1507 = vld [vmem:[%s1504 + $0x8] sm:$0xf]
        %v1532 = vunpack.c.l.b16 %v1480
        %v1533 = vunpack.c.l.b16 %v1481
        %v1534 = vunpack.c.l.b16 %v1482
        %v1535 = vunpack.c.l.b16 %v1483
        %v1536 = vunpack.c.l.b16 %v1484
        %v1537 = vunpack.c.l.b16 %v1485
        %v1538 = vunpack.c.l.b16 %v1486
        %v1539 = vunpack.c.l.b16 %v1487
        %v1540 = vunpack.c.l.b16 %v1488
        %v1541 = vunpack.c.l.b16 %v1489
        %v1542 = vunpack.c.l.b16 %v1490
        %v1543 = vunpack.c.l.b16 %v1491
        %v1544 = vunpack.c.l.b16 %v1492
        %v1545 = vunpack.c.l.b16 %v1493
        %v1546 = vunpack.c.l.b16 %v1494
        %v1547 = vunpack.c.l.b16 %v1495
        %v1548 = vunpack.c.l.b16 %v1496
        %v1549 = vunpack.c.l.b16 %v1497
        %v1550 = vunpack.c.l.b16 %v1498
        %v1551 = vunpack.c.l.b16 %v1499
        %v1552 = vunpack.c.l.b16 %v1500
        %v1553 = vunpack.c.l.b16 %v1501
        %v1554 = vunpack.c.l.b16 %v1502
        %v1555 = vunpack.c.l.b16 %v1503
        %v1556 = vpack.c.b16 %v1533, %v1532
        %v1557 = vpack.c.b16 %v1535, %v1534
        %v1558 = vpack.c.b16 %v1537, %v1536
        %v1559 = vpack.c.b16 %v1539, %v1538
        %v1560 = vpack.c.b16 %v1541, %v1540
        %v1561 = vpack.c.b16 %v1543, %v1542
        %v1562 = vpack.c.b16 %v1545, %v1544
        %v1563 = vpack.c.b16 %v1547, %v1546
        %v1564 = vpack.c.b16 %v1549, %v1548
        %v1565 = vpack.c.b16 %v1551, %v1550
        %v1566 = vpack.c.b16 %v1553, %v1552
        %v1567 = vpack.c.b16 %v1555, %v1554
        %v1571 = vunpack.c.l.b16 %v1505
        %v1572 = vunpack.c.l.b16 %v1506
        %v1573 = vunpack.c.l.b16 %v1507
        %v1574 = vpack.c.b16 %v1572, %v1571
        %v1575 = vpack.c.b16 %v1573, %v1573
        %vm1577 = vcmask 195584
        %v1579 = vsel %vm1577, %v1556, 0
        %v1582 = vsel %vm1577, %v1557, 0
        %v1585 = vsel %vm1577, %v1558, 0
        %v1588 = vsel %vm1577, %v1559, 0
        %v1591 = vsel %vm1577, %v1560, 0
        %v1594 = vsel %vm1577, %v1561, 0
        %v1597 = vsel %vm1577, %v1562, 0
        %v1600 = vsel %vm1577, %v1563, 0
        %v1603 = vsel %vm1577, %v1564, 0
        %v1606 = vsel %vm1577, %v1565, 0
        %v1609 = vsel %vm1577, %v1566, 0
        %v1612 = vsel %vm1577, %v1567, 0
        %vm1614 = vcmask 1043456
        %v1616 = vsel %vm1614, %v1575, 0
        %1618 = vmatprep.subr.bf16.mxu0 0
        %1619 = vmatpush1.bf16.msra.mxu0 %v1574
        %1620 = vmatprep.subr.bf16.mxu0 0
        %1621 = vmatpush1.bf16.msra.mxu0 %v1616
        %1622 = vmatprep.subr.bf16.mxu0 0
        %1623 = vmatpush1.bf16.msra.mxu0 0
        %1624 = vmatprep.subr.bf16.mxu0 0
        %1625 = vmatpush1.bf16.msra.mxu0 0
        %1626 = vmatprep.subr.bf16.mxu0 0
        %1627 = vmatpush1.bf16.msra.mxu0 0
        %1628 = vmatprep.subr.bf16.mxu0 0
        %1629 = vmatpush1.bf16.msra.mxu0 0
        %1630 = vmatprep.subr.bf16.mxu0 0
        %1631 = vmatpush1.bf16.msra.mxu0 0
        %1632 = vmatprep.subr.bf16.mxu0 0
        %1633 = vmatpush1.bf16.msra.mxu0 0
        %1634 = vmatprep.subr.bf16.mxu0 0
        %1635 = vmatpush1.bf16.msra.mxu0 0
        %1636 = vmatprep.subr.bf16.mxu0 0
        %1637 = vmatpush1.bf16.msra.mxu0 0
        %1638 = vmatprep.subr.bf16.mxu0 0
        %1639 = vmatpush1.bf16.msra.mxu0 0
        %1640 = vmatprep.subr.bf16.mxu0 0
        %1641 = vmatpush1.bf16.msra.mxu0 0
        %1642 = vmatprep.subr.bf16.mxu0 0
        %1643 = vmatpush1.bf16.msra.mxu0 0
        %1644 = vmatprep.subr.bf16.mxu0 0
        %1645 = vmatpush1.bf16.msra.mxu0 0
        %1646 = vmatprep.subr.bf16.mxu0 0
        %1647 = vmatpush1.bf16.msra.mxu0 0
        %1648 = vmatprep.subr.bf16.mxu0 0
        %1649 = vmatpush1.bf16.msra.mxu0 0
        %1650 = vmatprep.mubr.bf16.mxu0 0
        %1651 = vmatmul.mubr.bf16.gmra.mrb[0].mxu0 %v1579
        %v1652 = vpop.f32.mrb[0].mxu0
        %v1653 = vadd.f32 0.0, %v1652
        %v1654 = vpop.f32.mrb[0].mxu0
        %v1655 = vpop.f32.mrb[0].mxu0
        %v1656 = vadd.f32 0.0, %v1655
        %v1657 = vpop.f32.mrb[0].mxu0
        %1658 = vmatprep.mubr.bf16.mxu0 0
        %1659 = vmatmul.mubr.bf16.gmra.mrb[0].mxu0 %v1582
        %v1660 = vpop.f32.mrb[0].mxu0
        %v1661 = vadd.f32 0.0, %v1660
        %v1662 = vpop.f32.mrb[0].mxu0
        %v1663 = vpop.f32.mrb[0].mxu0
        %v1664 = vadd.f32 0.0, %v1663
        %v1665 = vpop.f32.mrb[0].mxu0
        %1666 = vmatprep.mubr.bf16.mxu0 0
        %1667 = vmatmul.mubr.bf16.gmra.mrb[0].mxu0 %v1585
        %v1668 = vpop.f32.mrb[0].mxu0
        %v1669 = vadd.f32 0.0, %v1668
        %v1670 = vpop.f32.mrb[0].mxu0
        %v1671 = vpop.f32.mrb[0].mxu0
        %v1672 = vadd.f32 0.0, %v1671
        %v1673 = vpop.f32.mrb[0].mxu0
        %1674 = vmatprep.mubr.bf16.mxu0 0
        %1675 = vmatmul.mubr.bf16.gmra.mrb[0].mxu0 %v1588
        %v1676 = vpop.f32.mrb[0].mxu0
        %v1677 = vadd.f32 0.0, %v1676
        %v1678 = vpop.f32.mrb[0].mxu0
        %v1679 = vpop.f32.mrb[0].mxu0
        %v1680 = vadd.f32 0.0, %v1679
        %v1681 = vpop.f32.mrb[0].mxu0
        %1682 = vmatprep.mubr.bf16.mxu0 0
        %1683 = vmatmul.mubr.bf16.gmra.mrb[0].mxu0 %v1591
        %v1684 = vpop.f32.mrb[0].mxu0
        %v1685 = vadd.f32 0.0, %v1684
        %v1686 = vpop.f32.mrb[0].mxu0
        %v1687 = vpop.f32.mrb[0].mxu0
        %v1688 = vadd.f32 0.0, %v1687
        %v1689 = vpop.f32.mrb[0].mxu0
        %1690 = vmatprep.mubr.bf16.mxu0 0
        %1691 = vmatmul.mubr.bf16.gmra.mrb[0].mxu0 %v1594
        %v1692 = vpop.f32.mrb[0].mxu0
        %v1693 = vadd.f32 0.0, %v1692
        %v1694 = vpop.f32.mrb[0].mxu0
        %v1695 = vpop.f32.mrb[0].mxu0
        %v1696 = vadd.f32 0.0, %v1695
        %v1697 = vpop.f32.mrb[0].mxu0
        %1698 = vmatprep.mubr.bf16.mxu0 0
        %1699 = vmatmul.mubr.bf16.gmra.mrb[0].mxu0 %v1597
        %v1700 = vpop.f32.mrb[0].mxu0
        %v1701 = vadd.f32 0.0, %v1700
        %v1702 = vpop.f32.mrb[0].mxu0
        %v1703 = vpop.f32.mrb[0].mxu0
        %v1704 = vadd.f32 0.0, %v1703
        %v1705 = vpop.f32.mrb[0].mxu0
        %1706 = vmatprep.mubr.bf16.mxu0 0
        %1707 = vmatmul.mubr.bf16.gmra.mrb[0].mxu0 %v1600
        %v1708 = vpop.f32.mrb[0].mxu0
        %v1709 = vadd.f32 0.0, %v1708
        %v1710 = vpop.f32.mrb[0].mxu0
        %v1711 = vpop.f32.mrb[0].mxu0
        %v1712 = vadd.f32 0.0, %v1711
        %v1713 = vpop.f32.mrb[0].mxu0
        %1714 = vmatprep.mubr.bf16.mxu0 0
        %1715 = vmatmul.mubr.bf16.gmra.mrb[0].mxu0 %v1603
        %v1716 = vpop.f32.mrb[0].mxu0
        %v1717 = vadd.f32 0.0, %v1716
        %v1718 = vpop.f32.mrb[0].mxu0
        %v1719 = vpop.f32.mrb[0].mxu0
        %v1720 = vadd.f32 0.0, %v1719
        %v1721 = vpop.f32.mrb[0].mxu0
        %1722 = vmatprep.mubr.bf16.mxu0 0
        %1723 = vmatmul.mubr.bf16.gmra.mrb[0].mxu0 %v1606
        %v1724 = vpop.f32.mrb[0].mxu0
        %v1725 = vadd.f32 0.0, %v1724
        %v1726 = vpop.f32.mrb[0].mxu0
        %v1727 = vpop.f32.mrb[0].mxu0
        %v1728 = vadd.f32 0.0, %v1727
        %v1729 = vpop.f32.mrb[0].mxu0
        %1730 = vmatprep.mubr.bf16.mxu0 0
        %1731 = vmatmul.mubr.bf16.gmra.mrb[0].mxu0 %v1609
        %v1732 = vpop.f32.mrb[0].mxu0
        %v1733 = vadd.f32 0.0, %v1732
        %v1734 = vpop.f32.mrb[0].mxu0
        %v1735 = vpop.f32.mrb[0].mxu0
        %v1736 = vadd.f32 0.0, %v1735
        %v1737 = vpop.f32.mrb[0].mxu0
        %1738 = vmatprep.mubr.bf16.mxu0 0
        %1739 = vmatmul.mubr.bf16.gmra.mrb[0].mxu0 %v1612
        %v1740 = vpop.f32.mrb[0].mxu0
        %v1741 = vadd.f32 0.0, %v1740
        %v1742 = vpop.f32.mrb[0].mxu0
        %v1743 = vpop.f32.mrb[0].mxu0
        %v1744 = vadd.f32 0.0, %v1743
        %v1745 = vpop.f32.mrb[0].mxu0
        %1746 = vdwg.mxu0
        %v1771 = vunpack.c.l.b16 %v1452
        %v1772 = vunpack.c.l.b16 %v1453
        %v1773 = vunpack.c.l.b16 %v1454
        %v1774 = vunpack.c.l.b16 %v1455
        %v1775 = vunpack.c.l.b16 %v1456
        %v1776 = vunpack.c.l.b16 %v1457
        %v1777 = vunpack.c.l.b16 %v1458
        %v1778 = vunpack.c.l.b16 %v1459
        %v1779 = vunpack.c.l.b16 %v1460
        %v1780 = vunpack.c.l.b16 %v1461
        %v1781 = vunpack.c.l.b16 %v1462
        %v1782 = vunpack.c.l.b16 %v1463
        %v1783 = vunpack.c.l.b16 %v1464
        %v1784 = vunpack.c.l.b16 %v1465
        %v1785 = vunpack.c.l.b16 %v1466
        %v1786 = vunpack.c.l.b16 %v1467
        %v1787 = vunpack.c.l.b16 %v1468
        %v1788 = vunpack.c.l.b16 %v1469
        %v1789 = vunpack.c.l.b16 %v1470
        %v1790 = vunpack.c.l.b16 %v1471
        %v1791 = vunpack.c.l.b16 %v1472
        %v1792 = vunpack.c.l.b16 %v1473
        %v1793 = vunpack.c.l.b16 %v1474
        %v1794 = vunpack.c.l.b16 %v1475
        %v1795 = vpack.c.b16 %v1772, %v1771
        %v1796 = vpack.c.b16 %v1774, %v1773
        %v1797 = vpack.c.b16 %v1776, %v1775
        %v1798 = vpack.c.b16 %v1778, %v1777
        %v1799 = vpack.c.b16 %v1780, %v1779
        %v1800 = vpack.c.b16 %v1782, %v1781
        %v1801 = vpack.c.b16 %v1784, %v1783
        %v1802 = vpack.c.b16 %v1786, %v1785
        %v1803 = vpack.c.b16 %v1788, %v1787
        %v1804 = vpack.c.b16 %v1790, %v1789
        %v1805 = vpack.c.b16 %v1792, %v1791
        %v1806 = vpack.c.b16 %v1794, %v1793
        %v1810 = vunpack.c.l.b16 %v1476
        %v1811 = vunpack.c.l.b16 %v1477
        %v1812 = vunpack.c.l.b16 %v1478
        %v1813 = vpack.c.b16 %v1811, %v1810
        %v1814 = vpack.c.b16 %v1812, %v1812
        %v1817 = vsel %vm1577, %v1795, 0
        %v1820 = vsel %vm1577, %v1796, 0
        %v1823 = vsel %vm1577, %v1797, 0
        %v1826 = vsel %vm1577, %v1798, 0
        %v1829 = vsel %vm1577, %v1799, 0
        %v1832 = vsel %vm1577, %v1800, 0
        %v1835 = vsel %vm1577, %v1801, 0
        %v1838 = vsel %vm1577, %v1802, 0
        %v1841 = vsel %vm1577, %v1803, 0
        %v1844 = vsel %vm1577, %v1804, 0
        %v1847 = vsel %vm1577, %v1805, 0
        %v1850 = vsel %vm1577, %v1806, 0
        %v1853 = vsel %vm1614, %v1814, 0
        %1855 = vmatprep.subr.bf16.mxu0 0
        %1856 = vmatpush1.bf16.msra.mxu0 %v1813
        %1857 = vmatprep.subr.bf16.mxu0 0
        %1858 = vmatpush1.bf16.msra.mxu0 %v1853
        %1859 = vmatprep.subr.bf16.mxu0 0
        %1860 = vmatpush1.bf16.msra.mxu0 0
        %1861 = vmatprep.subr.bf16.mxu0 0
        %1862 = vmatpush1.bf16.msra.mxu0 0
        %1863 = vmatprep.subr.bf16.mxu0 0
        %1864 = vmatpush1.bf16.msra.mxu0 0
        %1865 = vmatprep.subr.bf16.mxu0 0
        %1866 = vmatpush1.bf16.msra.mxu0 0
        %1867 = vmatprep.subr.bf16.mxu0 0
        %1868 = vmatpush1.bf16.msra.mxu0 0
        %1869 = vmatprep.subr.bf16.mxu0 0
        %1870 = vmatpush1.bf16.msra.mxu0 0
        %1871 = vmatprep.subr.bf16.mxu0 0
        %1872 = vmatpush1.bf16.msra.mxu0 0
        %1873 = vmatprep.subr.bf16.mxu0 0
        %1874 = vmatpush1.bf16.msra.mxu0 0
        %1875 = vmatprep.subr.bf16.mxu0 0
        %1876 = vmatpush1.bf16.msra.mxu0 0
        %1877 = vmatprep.subr.bf16.mxu0 0
        %1878 = vmatpush1.bf16.msra.mxu0 0
        %1879 = vmatprep.subr.bf16.mxu0 0
        %1880 = vmatpush1.bf16.msra.mxu0 0
        %1881 = vmatprep.subr.bf16.mxu0 0
        %1882 = vmatpush1.bf16.msra.mxu0 0
        %1883 = vmatprep.subr.bf16.mxu0 0
        %1884 = vmatpush1.bf16.msra.mxu0 0
        %1885 = vmatprep.subr.bf16.mxu0 0
        %1886 = vmatpush1.bf16.msra.mxu0 0
        %1887 = vmatprep.mubr.bf16.mxu0 0
        %1888 = vmatmul.mubr.bf16.gmra.mrb[0].mxu0 %v1817
        %v1889 = vpop.f32.mrb[0].mxu0
        %v1890 = vadd.f32 %v1653, %v1889
        %v1891 = vpop.f32.mrb[0].mxu0
        %v1892 = vpop.f32.mrb[0].mxu0
        %v1893 = vadd.f32 %v1656, %v1892
        %v1894 = vpop.f32.mrb[0].mxu0
        %1895 = vmatprep.mubr.bf16.mxu0 0
        %1896 = vmatmul.mubr.bf16.gmra.mrb[0].mxu0 %v1820
        %v1897 = vpop.f32.mrb[0].mxu0
        %v1898 = vadd.f32 %v1661, %v1897
        %v1899 = vpop.f32.mrb[0].mxu0
        %v1900 = vpop.f32.mrb[0].mxu0
        %v1901 = vadd.f32 %v1664, %v1900
        %v1902 = vpop.f32.mrb[0].mxu0
        %1903 = vmatprep.mubr.bf16.mxu0 0
        %1904 = vmatmul.mubr.bf16.gmra.mrb[0].mxu0 %v1823
        %v1905 = vpop.f32.mrb[0].mxu0
        %v1906 = vadd.f32 %v1669, %v1905
        %v1907 = vpop.f32.mrb[0].mxu0
        %v1908 = vpop.f32.mrb[0].mxu0
        %v1909 = vadd.f32 %v1672, %v1908
        %v1910 = vpop.f32.mrb[0].mxu0
        %1911 = vmatprep.mubr.bf16.mxu0 0
        %1912 = vmatmul.mubr.bf16.gmra.mrb[0].mxu0 %v1826
        %v1913 = vpop.f32.mrb[0].mxu0
        %v1914 = vadd.f32 %v1677, %v1913
        %v1915 = vpop.f32.mrb[0].mxu0
        %v1916 = vpop.f32.mrb[0].mxu0
        %v1917 = vadd.f32 %v1680, %v1916
        %v1918 = vpop.f32.mrb[0].mxu0
        %1919 = vmatprep.mubr.bf16.mxu0 0
        %1920 = vmatmul.mubr.bf16.gmra.mrb[0].mxu0 %v1829
        %v1921 = vpop.f32.mrb[0].mxu0
        %v1922 = vadd.f32 %v1685, %v1921
        %v1923 = vpop.f32.mrb[0].mxu0
        %v1924 = vpop.f32.mrb[0].mxu0
        %v1925 = vadd.f32 %v1688, %v1924
        %v1926 = vpop.f32.mrb[0].mxu0
        %1927 = vmatprep.mubr.bf16.mxu0 0
        %1928 = vmatmul.mubr.bf16.gmra.mrb[0].mxu0 %v1832
        %v1929 = vpop.f32.mrb[0].mxu0
        %v1930 = vadd.f32 %v1693, %v1929
        %v1931 = vpop.f32.mrb[0].mxu0
        %v1932 = vpop.f32.mrb[0].mxu0
        %v1933 = vadd.f32 %v1696, %v1932
        %v1934 = vpop.f32.mrb[0].mxu0
        %1935 = vmatprep.mubr.bf16.mxu0 0
        %1936 = vmatmul.mubr.bf16.gmra.mrb[0].mxu0 %v1835
        %v1937 = vpop.f32.mrb[0].mxu0
        %v1938 = vadd.f32 %v1701, %v1937
        %v1939 = vpop.f32.mrb[0].mxu0
        %v1940 = vpop.f32.mrb[0].mxu0
        %v1941 = vadd.f32 %v1704, %v1940
        %v1942 = vpop.f32.mrb[0].mxu0
        %1943 = vmatprep.mubr.bf16.mxu0 0
        %1944 = vmatmul.mubr.bf16.gmra.mrb[0].mxu0 %v1838
        %v1945 = vpop.f32.mrb[0].mxu0
        %v1946 = vadd.f32 %v1709, %v1945
        %v1947 = vpop.f32.mrb[0].mxu0
        %v1948 = vpop.f32.mrb[0].mxu0
        %v1949 = vadd.f32 %v1712, %v1948
        %v1950 = vpop.f32.mrb[0].mxu0
        %1951 = vmatprep.mubr.bf16.mxu0 0
        %1952 = vmatmul.mubr.bf16.gmra.mrb[0].mxu0 %v1841
        %v1953 = vpop.f32.mrb[0].mxu0
        %v1954 = vadd.f32 %v1717, %v1953
        %v1955 = vpop.f32.mrb[0].mxu0
        %v1956 = vpop.f32.mrb[0].mxu0
        %v1957 = vadd.f32 %v1720, %v1956
        %v1958 = vpop.f32.mrb[0].mxu0
        %1959 = vmatprep.mubr.bf16.mxu0 0
        %1960 = vmatmul.mubr.bf16.gmra.mrb[0].mxu0 %v1844
        %v1961 = vpop.f32.mrb[0].mxu0
        %v1962 = vadd.f32 %v1725, %v1961
        %v1963 = vpop.f32.mrb[0].mxu0
        %v1964 = vpop.f32.mrb[0].mxu0
        %v1965 = vadd.f32 %v1728, %v1964
        %v1966 = vpop.f32.mrb[0].mxu0
        %1967 = vmatprep.mubr.bf16.mxu0 0
        %1968 = vmatmul.mubr.bf16.gmra.mrb[0].mxu0 %v1847
        %v1969 = vpop.f32.mrb[0].mxu0
        %v1970 = vadd.f32 %v1733, %v1969
        %v1971 = vpop.f32.mrb[0].mxu0
        %v1972 = vpop.f32.mrb[0].mxu0
        %v1973 = vadd.f32 %v1736, %v1972
        %v1974 = vpop.f32.mrb[0].mxu0
        %1975 = vmatprep.mubr.bf16.mxu0 0
        %1976 = vmatmul.mubr.bf16.gmra.mrb[0].mxu0 %v1850
        %v1977 = vpop.f32.mrb[0].mxu0
        %v1978 = vadd.f32 %v1741, %v1977
        %v1979 = vpop.f32.mrb[0].mxu0
        %v1980 = vpop.f32.mrb[0].mxu0
        %v1981 = vadd.f32 %v1744, %v1980
        %v1982 = vpop.f32.mrb[0].mxu0
        %1983 = vdwg.mxu0
        %s1984 = scalar_lea.vmem [#allocation2], 24
        %v1985 = vld [vmem:[%s1984] sm:$0xf]
        %v1986 = vld [vmem:[%s1984 + $0x4] sm:$0xf]
        %v1987 = vld [vmem:[%s1984 + $0x8] sm:$0xf]
        %v1988 = vld [vmem:[%s1984 + $0xc] sm:$0xf]
        %v1989 = vld [vmem:[%s1984 + $0x10] sm:$0xf]
        %v1990 = vld [vmem:[%s1984 + $0x14] sm:$0xf]
        %v1991 = vld [vmem:[%s1984 + $0x18] sm:$0xf]
        %v1992 = vld [vmem:[%s1984 + $0x1c] sm:$0xf]
        %v1993 = vld [vmem:[%s1984 + $0x20] sm:$0xf]
        %v1994 = vld [vmem:[%s1984 + $0x24] sm:$0xf]
        %v1995 = vld [vmem:[%s1984 + $0x28] sm:$0xf]
        %v1996 = vld [vmem:[%s1984 + $0x2c] sm:$0xf]
        %v1997 = vld [vmem:[%s1984 + $0x30] sm:$0xf]
        %v1998 = vld [vmem:[%s1984 + $0x34] sm:$0xf]
        %v1999 = vld [vmem:[%s1984 + $0x38] sm:$0xf]
        %v2000 = vld [vmem:[%s1984 + $0x3c] sm:$0xf]
        %v2001 = vld [vmem:[%s1984 + $0x40] sm:$0xf]
        %v2002 = vld [vmem:[%s1984 + $0x44] sm:$0xf]
        %v2003 = vld [vmem:[%s1984 + $0x48] sm:$0xf]
        %v2004 = vld [vmem:[%s1984 + $0x4c] sm:$0xf]
        %v2005 = vld [vmem:[%s1984 + $0x50] sm:$0xf]
        %v2006 = vld [vmem:[%s1984 + $0x54] sm:$0xf]
        %v2007 = vld [vmem:[%s1984 + $0x58] sm:$0xf]
        %v2008 = vld [vmem:[%s1984 + $0x5c] sm:$0xf]
        %s2009 = scalar_lea.vmem %s5, 24
        %v2010 = vld [vmem:[%s2009] sm:$0xf]
        %v2011 = vld [vmem:[%s2009 + $0x4] sm:$0xf]
        %v2012 = vld [vmem:[%s2009 + $0x8] sm:$0xf]
        %v2037 = vunpack.c.l.b16 %v1985
        %v2038 = vunpack.c.l.b16 %v1986
        %v2039 = vunpack.c.l.b16 %v1987
        %v2040 = vunpack.c.l.b16 %v1988
        %v2041 = vunpack.c.l.b16 %v1989
        %v2042 = vunpack.c.l.b16 %v1990
        %v2043 = vunpack.c.l.b16 %v1991
        %v2044 = vunpack.c.l.b16 %v1992
        %v2045 = vunpack.c.l.b16 %v1993
        %v2046 = vunpack.c.l.b16 %v1994
        %v2047 = vunpack.c.l.b16 %v1995
        %v2048 = vunpack.c.l.b16 %v1996
        %v2049 = vunpack.c.l.b16 %v1997
        %v2050 = vunpack.c.l.b16 %v1998
        %v2051 = vunpack.c.l.b16 %v1999
        %v2052 = vunpack.c.l.b16 %v2000
        %v2053 = vunpack.c.l.b16 %v2001
        %v2054 = vunpack.c.l.b16 %v2002
        %v2055 = vunpack.c.l.b16 %v2003
        %v2056 = vunpack.c.l.b16 %v2004
        %v2057 = vunpack.c.l.b16 %v2005
        %v2058 = vunpack.c.l.b16 %v2006
        %v2059 = vunpack.c.l.b16 %v2007
        %v2060 = vunpack.c.l.b16 %v2008
        %v2061 = vpack.c.b16 %v2038, %v2037
        %v2062 = vpack.c.b16 %v2040, %v2039
        %v2063 = vpack.c.b16 %v2042, %v2041
        %v2064 = vpack.c.b16 %v2044, %v2043
        %v2065 = vpack.c.b16 %v2046, %v2045
        %v2066 = vpack.c.b16 %v2048, %v2047
        %v2067 = vpack.c.b16 %v2050, %v2049
        %v2068 = vpack.c.b16 %v2052, %v2051
        %v2069 = vpack.c.b16 %v2054, %v2053
        %v2070 = vpack.c.b16 %v2056, %v2055
        %v2071 = vpack.c.b16 %v2058, %v2057
        %v2072 = vpack.c.b16 %v2060, %v2059
        %v2076 = vunpack.c.l.b16 %v2010
        %v2077 = vunpack.c.l.b16 %v2011
        %v2078 = vunpack.c.l.b16 %v2012
        %v2079 = vpack.c.b16 %v2077, %v2076
        %v2080 = vpack.c.b16 %v2078, %v2078
        %v2083 = vsel %vm1577, %v2061, 0
        %v2086 = vsel %vm1577, %v2062, 0
        %v2089 = vsel %vm1577, %v2063, 0
        %v2092 = vsel %vm1577, %v2064, 0
        %v2095 = vsel %vm1577, %v2065, 0
        %v2098 = vsel %vm1577, %v2066, 0
        %v2101 = vsel %vm1577, %v2067, 0
        %v2104 = vsel %vm1577, %v2068, 0
        %v2107 = vsel %vm1577, %v2069, 0
        %v2110 = vsel %vm1577, %v2070, 0
        %v2113 = vsel %vm1577, %v2071, 0
        %v2116 = vsel %vm1577, %v2072, 0
        %v2119 = vsel %vm1614, %v2080, 0
        %2121 = vmatprep.subr.bf16.mxu0 0
        %2122 = vmatpush1.bf16.msra.mxu0 %v2079
        %2123 = vmatprep.subr.bf16.mxu0 0
        %2124 = vmatpush1.bf16.msra.mxu0 %v2119
        %2125 = vmatprep.subr.bf16.mxu0 0
        %2126 = vmatpush1.bf16.msra.mxu0 0
        %2127 = vmatprep.subr.bf16.mxu0 0
        %2128 = vmatpush1.bf16.msra.mxu0 0
        %2129 = vmatprep.subr.bf16.mxu0 0
        %2130 = vmatpush1.bf16.msra.mxu0 0
        %2131 = vmatprep.subr.bf16.mxu0 0
        %2132 = vmatpush1.bf16.msra.mxu0 0
        %2133 = vmatprep.subr.bf16.mxu0 0
        %2134 = vmatpush1.bf16.msra.mxu0 0
        %2135 = vmatprep.subr.bf16.mxu0 0
        %2136 = vmatpush1.bf16.msra.mxu0 0
        %2137 = vmatprep.subr.bf16.mxu0 0
        %2138 = vmatpush1.bf16.msra.mxu0 0
        %2139 = vmatprep.subr.bf16.mxu0 0
        %2140 = vmatpush1.bf16.msra.mxu0 0
        %2141 = vmatprep.subr.bf16.mxu0 0
        %2142 = vmatpush1.bf16.msra.mxu0 0
        %2143 = vmatprep.subr.bf16.mxu0 0
        %2144 = vmatpush1.bf16.msra.mxu0 0
        %2145 = vmatprep.subr.bf16.mxu0 0
        %2146 = vmatpush1.bf16.msra.mxu0 0
        %2147 = vmatprep.subr.bf16.mxu0 0
        %2148 = vmatpush1.bf16.msra.mxu0 0
        %2149 = vmatprep.subr.bf16.mxu0 0
        %2150 = vmatpush1.bf16.msra.mxu0 0
        %2151 = vmatprep.subr.bf16.mxu0 0
        %2152 = vmatpush1.bf16.msra.mxu0 0
        %2153 = vmatprep.mubr.bf16.mxu0 0
        %2154 = vmatmul.mubr.bf16.gmra.mrb[0].mxu0 %v2083
        %v2155 = vpop.f32.mrb[0].mxu0
        %v2156 = vadd.f32 0.0, %v2155
        %v2157 = vpop.f32.mrb[0].mxu0
        %v2158 = vpop.f32.mrb[0].mxu0
        %v2159 = vadd.f32 0.0, %v2158
        %v2160 = vpop.f32.mrb[0].mxu0
        %2161 = vmatprep.mubr.bf16.mxu0 0
        %2162 = vmatmul.mubr.bf16.gmra.mrb[0].mxu0 %v2086
        %v2163 = vpop.f32.mrb[0].mxu0
        %v2164 = vadd.f32 0.0, %v2163
        %v2165 = vpop.f32.mrb[0].mxu0
        %v2166 = vpop.f32.mrb[0].mxu0
        %v2167 = vadd.f32 0.0, %v2166
        %v2168 = vpop.f32.mrb[0].mxu0
        %2169 = vmatprep.mubr.bf16.mxu0 0
        %2170 = vmatmul.mubr.bf16.gmra.mrb[0].mxu0 %v2089
        %v2171 = vpop.f32.mrb[0].mxu0
        %v2172 = vadd.f32 0.0, %v2171
        %v2173 = vpop.f32.mrb[0].mxu0
        %v2174 = vpop.f32.mrb[0].mxu0
        %v2175 = vadd.f32 0.0, %v2174
        %v2176 = vpop.f32.mrb[0].mxu0
        %2177 = vmatprep.mubr.bf16.mxu0 0
        %2178 = vmatmul.mubr.bf16.gmra.mrb[0].mxu0 %v2092
        %v2179 = vpop.f32.mrb[0].mxu0
        %v2180 = vadd.f32 0.0, %v2179
        %v2181 = vpop.f32.mrb[0].mxu0
        %v2182 = vpop.f32.mrb[0].mxu0
        %v2183 = vadd.f32 0.0, %v2182
        %v2184 = vpop.f32.mrb[0].mxu0
        %2185 = vmatprep.mubr.bf16.mxu0 0
        %2186 = vmatmul.mubr.bf16.gmra.mrb[0].mxu0 %v2095
        %v2187 = vpop.f32.mrb[0].mxu0
        %v2188 = vadd.f32 0.0, %v2187
        %v2189 = vpop.f32.mrb[0].mxu0
        %v2190 = vpop.f32.mrb[0].mxu0
        %v2191 = vadd.f32 0.0, %v2190
        %v2192 = vpop.f32.mrb[0].mxu0
        %2193 = vmatprep.mubr.bf16.mxu0 0
        %2194 = vmatmul.mubr.bf16.gmra.mrb[0].mxu0 %v2098
        %v2195 = vpop.f32.mrb[0].mxu0
        %v2196 = vadd.f32 0.0, %v2195
        %v2197 = vpop.f32.mrb[0].mxu0
        %v2198 = vpop.f32.mrb[0].mxu0
        %v2199 = vadd.f32 0.0, %v2198
        %v2200 = vpop.f32.mrb[0].mxu0
        %2201 = vmatprep.mubr.bf16.mxu0 0
        %2202 = vmatmul.mubr.bf16.gmra.mrb[0].mxu0 %v2101
        %v2203 = vpop.f32.mrb[0].mxu0
        %v2204 = vadd.f32 0.0, %v2203
        %v2205 = vpop.f32.mrb[0].mxu0
        %v2206 = vpop.f32.mrb[0].mxu0
        %v2207 = vadd.f32 0.0, %v2206
        %v2208 = vpop.f32.mrb[0].mxu0
        %2209 = vmatprep.mubr.bf16.mxu0 0
        %2210 = vmatmul.mubr.bf16.gmra.mrb[0].mxu0 %v2104
        %v2211 = vpop.f32.mrb[0].mxu0
        %v2212 = vadd.f32 0.0, %v2211
        %v2213 = vpop.f32.mrb[0].mxu0
        %v2214 = vpop.f32.mrb[0].mxu0
        %v2215 = vadd.f32 0.0, %v2214
        %v2216 = vpop.f32.mrb[0].mxu0
        %2217 = vmatprep.mubr.bf16.mxu0 0
        %2218 = vmatmul.mubr.bf16.gmra.mrb[0].mxu0 %v2107
        %v2219 = vpop.f32.mrb[0].mxu0
        %v2220 = vadd.f32 0.0, %v2219
        %v2221 = vpop.f32.mrb[0].mxu0
        %v2222 = vpop.f32.mrb[0].mxu0
        %v2223 = vadd.f32 0.0, %v2222
        %v2224 = vpop.f32.mrb[0].mxu0
        %2225 = vmatprep.mubr.bf16.mxu0 0
        %2226 = vmatmul.mubr.bf16.gmra.mrb[0].mxu0 %v2110
        %v2227 = vpop.f32.mrb[0].mxu0
        %v2228 = vadd.f32 0.0, %v2227
        %v2229 = vpop.f32.mrb[0].mxu0
        %v2230 = vpop.f32.mrb[0].mxu0
        %v2231 = vadd.f32 0.0, %v2230
        %v2232 = vpop.f32.mrb[0].mxu0
        %2233 = vmatprep.mubr.bf16.mxu0 0
        %2234 = vmatmul.mubr.bf16.gmra.mrb[0].mxu0 %v2113
        %v2235 = vpop.f32.mrb[0].mxu0
        %v2236 = vadd.f32 0.0, %v2235
        %v2237 = vpop.f32.mrb[0].mxu0
        %v2238 = vpop.f32.mrb[0].mxu0
        %v2239 = vadd.f32 0.0, %v2238
        %v2240 = vpop.f32.mrb[0].mxu0
        %2241 = vmatprep.mubr.bf16.mxu0 0
        %2242 = vmatmul.mubr.bf16.gmra.mrb[0].mxu0 %v2116
        %v2243 = vpop.f32.mrb[0].mxu0
        %v2244 = vadd.f32 0.0, %v2243
        %v2245 = vpop.f32.mrb[0].mxu0
        %v2246 = vpop.f32.mrb[0].mxu0
        %v2247 = vadd.f32 0.0, %v2246
        %v2248 = vpop.f32.mrb[0].mxu0
        %2249 = vdwg.mxu0
        %v2250 = vadd.f32 %v1890, %v2156
        %v2251 = vadd.f32 %v1893, %v2159
        %v2252 = vadd.f32 %v1898, %v2164
        %v2253 = vadd.f32 %v1901, %v2167
        %v2254 = vadd.f32 %v1906, %v2172
        %v2255 = vadd.f32 %v1909, %v2175
        %v2256 = vadd.f32 %v1914, %v2180
        %v2257 = vadd.f32 %v1917, %v2183
        %v2258 = vadd.f32 %v1922, %v2188
        %v2259 = vadd.f32 %v1925, %v2191
        %v2260 = vadd.f32 %v1930, %v2196
        %v2261 = vadd.f32 %v1933, %v2199
        %v2262 = vadd.f32 %v1938, %v2204
        %v2263 = vadd.f32 %v1941, %v2207
        %v2264 = vadd.f32 %v1946, %v2212
        %v2265 = vadd.f32 %v1949, %v2215
        %v2266 = vadd.f32 %v1954, %v2220
        %v2267 = vadd.f32 %v1957, %v2223
        %v2268 = vadd.f32 %v1962, %v2228
        %v2269 = vadd.f32 %v1965, %v2231
        %v2270 = vadd.f32 %v1970, %v2236
        %v2271 = vadd.f32 %v1973, %v2239
        %v2272 = vadd.f32 %v1978, %v2244
        %v2273 = vadd.f32 %v1981, %v2247
        %v2274 = vld [vmem:[%s6] sm:$0x1]
        %v2276 = vlaneseq
        %v2277 = vshrl.u32 %v2276, 7
        %v2278 = vsub.s32 0, %v2277
        %v2279 = vrot.slane %v2274, %v2278
        %v2281 = vadd.f32 %v2250, %v2279
        %v2282 = vadd.f32 %v2251, %v2279
        %v2283 = vadd.f32 %v2252, %v2279
        %v2284 = vadd.f32 %v2253, %v2279
        %v2285 = vadd.f32 %v2254, %v2279
        %v2286 = vadd.f32 %v2255, %v2279
        %v2287 = vadd.f32 %v2256, %v2279
        %v2288 = vadd.f32 %v2257, %v2279
        %v2289 = vadd.f32 %v2258, %v2279
        %v2290 = vadd.f32 %v2259, %v2279
        %v2291 = vadd.f32 %v2260, %v2279
        %v2292 = vadd.f32 %v2261, %v2279
        %v2293 = vadd.f32 %v2262, %v2279
        %v2294 = vadd.f32 %v2263, %v2279
        %v2295 = vadd.f32 %v2264, %v2279
        %v2296 = vadd.f32 %v2265, %v2279
        %v2297 = vadd.f32 %v2266, %v2279
        %v2298 = vadd.f32 %v2267, %v2279
        %v2299 = vadd.f32 %v2268, %v2279
        %v2300 = vadd.f32 %v2269, %v2279
        %v2301 = vadd.f32 %v2270, %v2279
        %v2302 = vadd.f32 %v2271, %v2279
        %v2303 = vadd.f32 %v2272, %v2279
        %v2304 = vadd.f32 %v2273, %v2279
        %v2305 = vmax.f32 %v2281, 0.0
        %v2306 = vmax.f32 %v2282, 0.0
        %v2307 = vmax.f32 %v2283, 0.0
        %v2308 = vmax.f32 %v2284, 0.0
        %v2309 = vmax.f32 %v2285, 0.0
        %v2310 = vmax.f32 %v2286, 0.0
        %v2311 = vmax.f32 %v2287, 0.0
        %v2312 = vmax.f32 %v2288, 0.0
        %v2313 = vmax.f32 %v2289, 0.0
        %v2314 = vmax.f32 %v2290, 0.0
        %v2315 = vmax.f32 %v2291, 0.0
        %v2316 = vmax.f32 %v2292, 0.0
        %v2317 = vmax.f32 %v2293, 0.0
        %v2318 = vmax.f32 %v2294, 0.0
        %v2319 = vmax.f32 %v2295, 0.0
        %v2320 = vmax.f32 %v2296, 0.0
        %v2321 = vmax.f32 %v2297, 0.0
        %v2322 = vmax.f32 %v2298, 0.0
        %v2323 = vmax.f32 %v2299, 0.0
        %v2324 = vmax.f32 %v2300, 0.0
        %v2325 = vmax.f32 %v2301, 0.0
        %v2326 = vmax.f32 %v2302, 0.0
        %v2327 = vmax.f32 %v2303, 0.0
        %v2328 = vmax.f32 %v2304, 0.0
        %v2329 = vpack.c.bf16 %v2306, %v2305
        %v2330 = vpack.c.bf16 %v2308, %v2307
        %v2331 = vpack.c.bf16 %v2310, %v2309
        %v2332 = vpack.c.bf16 %v2312, %v2311
        %v2333 = vpack.c.bf16 %v2314, %v2313
        %v2334 = vpack.c.bf16 %v2316, %v2315
        %v2335 = vpack.c.bf16 %v2318, %v2317
        %v2336 = vpack.c.bf16 %v2320, %v2319
        %v2337 = vpack.c.bf16 %v2322, %v2321
        %v2338 = vpack.c.bf16 %v2324, %v2323
        %v2339 = vpack.c.bf16 %v2326, %v2325
        %v2340 = vpack.c.bf16 %v2328, %v2327
        %v2353 = vunpack.c.l.b16 %v2329
        %v2354 = vunpack.c.h.b16 %v2329
        %v2355 = vunpack.c.h.b16 %v2330
        %v2356 = vunpack.c.l.b16 %v2331
        %v2357 = vunpack.c.l.b16 %v2332
        %v2358 = vunpack.c.h.b16 %v2332
        %v2359 = vunpack.c.h.b16 %v2333
        %v2360 = vunpack.c.l.b16 %v2334
        %v2361 = vunpack.c.l.b16 %v2335
        %v2362 = vunpack.c.h.b16 %v2335
        %v2363 = vunpack.c.h.b16 %v2336
        %v2364 = vunpack.c.l.b16 %v2337
        %v2365 = vunpack.c.l.b16 %v2338
        %v2366 = vunpack.c.h.b16 %v2338
        %v2367 = vunpack.c.h.b16 %v2339
        %v2368 = vunpack.c.l.b16 %v2340
        %v2369 = vld [vmem:[%s7] sm:$0xf]
        %v2370 = vld [vmem:[%s8] sm:$0x1]
        %v2372 = vlaneseq
        %v2373 = vshrl.u32 %v2372, 7
        %v2374 = vsub.s32 0, %v2373
        %v2375 = vrot.slane %v2370, %v2374
        %v2377 = vpack.c.b16 %v2354, %v2353
        %v2378 = vpack.c.b16 %v2356, %v2355
        %v2379 = vpack.c.b16 %v2358, %v2357
        %v2380 = vpack.c.b16 %v2360, %v2359
        %v2381 = vpack.c.b16 %v2362, %v2361
        %v2382 = vpack.c.b16 %v2364, %v2363
        %v2383 = vpack.c.b16 %v2366, %v2365
        %v2384 = vpack.c.b16 %v2368, %v2367
        %vm2385 = vcmask 64512
        %v2387 = vsel %vm2385, %v2377, 0
        %v2390 = vsel %vm2385, %v2378, 0
        %v2393 = vsel %vm2385, %v2379, 0
        %v2396 = vsel %vm2385, %v2380, 0
        %v2399 = vsel %vm2385, %v2381, 0
        %v2402 = vsel %vm2385, %v2382, 0
        %v2405 = vsel %vm2385, %v2383, 0
        %v2408 = vsel %vm2385, %v2384, 0
        %v2411 = vsel %vm1614, %v2369, 0
        %2413 = vmatprep.subr.bf16.mxu0 0
        %2414 = vmatpush1.bf16.msra.mxu0 %v2411
        %2415 = vmatprep.subr.bf16.mxu0 0
        %2416 = vmatpush1.bf16.msra.mxu0 0
        %2417 = vmatprep.subr.bf16.mxu0 0
        %2418 = vmatpush1.bf16.msra.mxu0 0
        %2419 = vmatprep.subr.bf16.mxu0 0
        %2420 = vmatpush1.bf16.msra.mxu0 0
        %2421 = vmatprep.subr.bf16.mxu0 0
        %2422 = vmatpush1.bf16.msra.mxu0 0
        %2423 = vmatprep.subr.bf16.mxu0 0
        %2424 = vmatpush1.bf16.msra.mxu0 0
        %2425 = vmatprep.subr.bf16.mxu0 0
        %2426 = vmatpush1.bf16.msra.mxu0 0
        %2427 = vmatprep.subr.bf16.mxu0 0
        %2428 = vmatpush1.bf16.msra.mxu0 0
        %2429 = vmatprep.subr.bf16.mxu0 0
        %2430 = vmatpush1.bf16.msra.mxu0 0
        %2431 = vmatprep.subr.bf16.mxu0 0
        %2432 = vmatpush1.bf16.msra.mxu0 0
        %2433 = vmatprep.subr.bf16.mxu0 0
        %2434 = vmatpush1.bf16.msra.mxu0 0
        %2435 = vmatprep.subr.bf16.mxu0 0
        %2436 = vmatpush1.bf16.msra.mxu0 0
        %2437 = vmatprep.subr.bf16.mxu0 0
        %2438 = vmatpush1.bf16.msra.mxu0 0
        %2439 = vmatprep.subr.bf16.mxu0 0
        %2440 = vmatpush1.bf16.msra.mxu0 0
        %2441 = vmatprep.subr.bf16.mxu0 0
        %2442 = vmatpush1.bf16.msra.mxu0 0
        %2443 = vmatprep.subr.bf16.mxu0 0
        %2444 = vmatpush1.bf16.msra.mxu0 0
        %2445 = vmatprep.mubr.bf16.mxu0 0
        %2446 = vmatmul.mubr.bf16.gmra.mrb[0].mxu0 %v2387
        %v2447 = vpop.f32.mrb[0].mxu0
        %v2448 = vadd.f32 %v2375, %v2447
        %v2449 = vpop.f32.mrb[0].mxu0
        %v2450 = vpop.f32.mrb[0].mxu0
        %v2451 = vadd.f32 %v2375, %v2450
        %v2452 = vpop.f32.mrb[0].mxu0
        %2453 = vmatprep.mubr.bf16.mxu0 0
        %2454 = vmatmul.mubr.bf16.gmra.mrb[0].mxu0 %v2390
        %v2455 = vpop.f32.mrb[0].mxu0
        %v2456 = vadd.f32 %v2375, %v2455
        %v2457 = vpop.f32.mrb[0].mxu0
        %v2458 = vpop.f32.mrb[0].mxu0
        %v2459 = vadd.f32 %v2375, %v2458
        %v2460 = vpop.f32.mrb[0].mxu0
        %2461 = vmatprep.mubr.bf16.mxu0 0
        %2462 = vmatmul.mubr.bf16.gmra.mrb[0].mxu0 %v2393
        %v2463 = vpop.f32.mrb[0].mxu0
        %v2464 = vadd.f32 %v2375, %v2463
        %v2465 = vpop.f32.mrb[0].mxu0
        %v2466 = vpop.f32.mrb[0].mxu0
        %v2467 = vadd.f32 %v2375, %v2466
        %v2468 = vpop.f32.mrb[0].mxu0
        %2469 = vmatprep.mubr.bf16.mxu0 0
        %2470 = vmatmul.mubr.bf16.gmra.mrb[0].mxu0 %v2396
        %v2471 = vpop.f32.mrb[0].mxu0
        %v2472 = vadd.f32 %v2375, %v2471
        %v2473 = vpop.f32.mrb[0].mxu0
        %v2474 = vpop.f32.mrb[0].mxu0
        %v2475 = vadd.f32 %v2375, %v2474
        %v2476 = vpop.f32.mrb[0].mxu0
        %2477 = vmatprep.mubr.bf16.mxu0 0
        %2478 = vmatmul.mubr.bf16.gmra.mrb[0].mxu0 %v2399
        %v2479 = vpop.f32.mrb[0].mxu0
        %v2480 = vadd.f32 %v2375, %v2479
        %v2481 = vpop.f32.mrb[0].mxu0
        %v2482 = vpop.f32.mrb[0].mxu0
        %v2483 = vadd.f32 %v2375, %v2482
        %v2484 = vpop.f32.mrb[0].mxu0
        %2485 = vmatprep.mubr.bf16.mxu0 0
        %2486 = vmatmul.mubr.bf16.gmra.mrb[0].mxu0 %v2402
        %v2487 = vpop.f32.mrb[0].mxu0
        %v2488 = vadd.f32 %v2375, %v2487
        %v2489 = vpop.f32.mrb[0].mxu0
        %v2490 = vpop.f32.mrb[0].mxu0
        %v2491 = vadd.f32 %v2375, %v2490
        %v2492 = vpop.f32.mrb[0].mxu0
        %2493 = vmatprep.mubr.bf16.mxu0 0
        %2494 = vmatmul.mubr.bf16.gmra.mrb[0].mxu0 %v2405
        %v2495 = vpop.f32.mrb[0].mxu0
        %v2496 = vadd.f32 %v2375, %v2495
        %v2497 = vpop.f32.mrb[0].mxu0
        %v2498 = vpop.f32.mrb[0].mxu0
        %v2499 = vadd.f32 %v2375, %v2498
        %v2500 = vpop.f32.mrb[0].mxu0
        %2501 = vmatprep.mubr.bf16.mxu0 0
        %2502 = vmatmul.mubr.bf16.gmra.mrb[0].mxu0 %v2408
        %v2503 = vpop.f32.mrb[0].mxu0
        %v2504 = vadd.f32 %v2375, %v2503
        %v2505 = vpop.f32.mrb[0].mxu0
        %v2506 = vpop.f32.mrb[0].mxu0
        %v2507 = vadd.f32 %v2375, %v2506
        %v2508 = vpop.f32.mrb[0].mxu0
        %2509 = vdwg.mxu0
        %v2510 = vld [vmem:[%s452] sm:$0xf]
        %v2511 = vld [vmem:[%s452 + $0x4] sm:$0xf]
        %v2512 = vld [vmem:[%s452 + $0x8] sm:$0xf]
        %v2513 = vld [vmem:[%s452 + $0xc] sm:$0xf]
        %v2514 = vld [vmem:[%s452 + $0x10] sm:$0xf]
        %v2515 = vld [vmem:[%s452 + $0x14] sm:$0xf]
        %v2516 = vld [vmem:[%s452 + $0x18] sm:$0xf]
        %v2517 = vld [vmem:[%s452 + $0x1c] sm:$0xf]
        %v2518 = vld [vmem:[%s452 + $0x20] sm:$0xf]
        %v2519 = vld [vmem:[%s452 + $0x24] sm:$0xf]
        %v2520 = vld [vmem:[%s452 + $0x28] sm:$0xf]
        %v2521 = vld [vmem:[%s452 + $0x2c] sm:$0xf]
        %v2522 = vld [vmem:[%s452 + $0x30] sm:$0xf]
        %v2523 = vld [vmem:[%s452 + $0x34] sm:$0xf]
        %v2524 = vld [vmem:[%s452 + $0x38] sm:$0xf]
        %v2525 = vld [vmem:[%s452 + $0x3c] sm:$0xf]
        %v2526 = vunpack.c.l.bf16 %v2510
        %v2527 = vunpack.c.l.bf16 %v2511
        %v2528 = vunpack.c.l.bf16 %v2512
        %v2529 = vunpack.c.l.bf16 %v2513
        %v2530 = vunpack.c.l.bf16 %v2514
        %v2531 = vunpack.c.l.bf16 %v2515
        %v2532 = vunpack.c.l.bf16 %v2516
        %v2533 = vunpack.c.l.bf16 %v2517
        %v2534 = vunpack.c.l.bf16 %v2518
        %v2535 = vunpack.c.l.bf16 %v2519
        %v2536 = vunpack.c.l.bf16 %v2520
        %v2537 = vunpack.c.l.bf16 %v2521
        %v2538 = vunpack.c.l.bf16 %v2522
        %v2539 = vunpack.c.l.bf16 %v2523
        %v2540 = vunpack.c.l.bf16 %v2524
        %v2541 = vunpack.c.l.bf16 %v2525
        %v2542 = vadd.f32 %v2448, %v2526
        %v2543 = vadd.f32 %v2451, %v2527
        %v2544 = vadd.f32 %v2456, %v2528
        %v2545 = vadd.f32 %v2459, %v2529
        %v2546 = vadd.f32 %v2464, %v2530
        %v2547 = vadd.f32 %v2467, %v2531
        %v2548 = vadd.f32 %v2472, %v2532
        %v2549 = vadd.f32 %v2475, %v2533
        %v2550 = vadd.f32 %v2480, %v2534
        %v2551 = vadd.f32 %v2483, %v2535
        %v2552 = vadd.f32 %v2488, %v2536
        %v2553 = vadd.f32 %v2491, %v2537
        %v2554 = vadd.f32 %v2496, %v2538
        %v2555 = vadd.f32 %v2499, %v2539
        %v2556 = vadd.f32 %v2504, %v2540
        %v2557 = vadd.f32 %v2507, %v2541
        %v2558 = vmax.f32 %v2542, 0.0
        %v2559 = vmax.f32 %v2543, 0.0
        %v2560 = vmax.f32 %v2544, 0.0
        %v2561 = vmax.f32 %v2545, 0.0
        %v2562 = vmax.f32 %v2546, 0.0
        %v2563 = vmax.f32 %v2547, 0.0
        %v2564 = vmax.f32 %v2548, 0.0
        %v2565 = vmax.f32 %v2549, 0.0
        %v2566 = vmax.f32 %v2550, 0.0
        %v2567 = vmax.f32 %v2551, 0.0
        %v2568 = vmax.f32 %v2552, 0.0
        %v2569 = vmax.f32 %v2553, 0.0
        %v2570 = vmax.f32 %v2554, 0.0
        %v2571 = vmax.f32 %v2555, 0.0
        %v2572 = vmax.f32 %v2556, 0.0
        %v2573 = vmax.f32 %v2557, 0.0
        %v2574 = vpack.c.bf16 %v2559, %v2558
        %v2575 = vpack.c.bf16 %v2561, %v2560
        %v2576 = vpack.c.bf16 %v2563, %v2562
        %v2577 = vpack.c.bf16 %v2565, %v2564
        %v2578 = vpack.c.bf16 %v2567, %v2566
        %v2579 = vpack.c.bf16 %v2569, %v2568
        %v2580 = vpack.c.bf16 %v2571, %v2570
        %v2581 = vpack.c.bf16 %v2573, %v2572
        %v2590 = vunpack.c.l.b16 %v2574
        %v2591 = vunpack.c.h.b16 %v2574
        %v2592 = vunpack.c.l.b16 %v2575
        %v2593 = vunpack.c.h.b16 %v2575
        %v2594 = vunpack.c.l.b16 %v2576
        %v2595 = vunpack.c.h.b16 %v2576
        %v2596 = vunpack.c.l.b16 %v2577
        %v2597 = vunpack.c.h.b16 %v2577
        %v2598 = vunpack.c.l.b16 %v2578
        %v2599 = vunpack.c.h.b16 %v2578
        %v2600 = vunpack.c.l.b16 %v2579
        %v2601 = vunpack.c.h.b16 %v2579
        %v2602 = vunpack.c.l.b16 %v2580
        %v2603 = vunpack.c.h.b16 %v2580
        %v2604 = vunpack.c.l.b16 %v2581
        %v2605 = vunpack.c.h.b16 %v2581
        %v2606 = vpack.c.b16 %v2590, %v2590
        %v2607 = vpack.c.b16 %v2591, %v2591
        %v2608 = vpack.c.b16 %v2592, %v2592
        %v2609 = vpack.c.b16 %v2593, %v2593
        %v2610 = vpack.c.b16 %v2594, %v2594
        %v2611 = vpack.c.b16 %v2595, %v2595
        %v2612 = vpack.c.b16 %v2596, %v2596
        %v2613 = vpack.c.b16 %v2597, %v2597
        %v2614 = vpack.c.b16 %v2598, %v2598
        %v2615 = vpack.c.b16 %v2599, %v2599
        %v2616 = vpack.c.b16 %v2600, %v2600
        %v2617 = vpack.c.b16 %v2601, %v2601
        %v2618 = vpack.c.b16 %v2602, %v2602
        %v2619 = vpack.c.b16 %v2603, %v2603
        %v2620 = vpack.c.b16 %v2604, %v2604
        %v2621 = vpack.c.b16 %v2605, %v2605
        %vm2638 = vcmask 257024
        %2639 = vst.msk [vmem:[%s442] sm:$0xf] %vm2638, %v2606
        %2640 = vst.msk [vmem:[%s442 + $0x4] sm:$0xf] %vm2638, %v2607
        %2641 = vst.msk [vmem:[%s442 + $0x8] sm:$0xf] %vm2638, %v2608
        %2642 = vst.msk [vmem:[%s442 + $0xc] sm:$0xf] %vm2638, %v2609
        %2643 = vst.msk [vmem:[%s442 + $0x10] sm:$0xf] %vm2638, %v2610
        %2644 = vst.msk [vmem:[%s442 + $0x14] sm:$0xf] %vm2638, %v2611
        %2645 = vst.msk [vmem:[%s442 + $0x18] sm:$0xf] %vm2638, %v2612
        %2646 = vst.msk [vmem:[%s442 + $0x1c] sm:$0xf] %vm2638, %v2613
        %2647 = vst.msk [vmem:[%s442 + $0x20] sm:$0xf] %vm2638, %v2614
        %2648 = vst.msk [vmem:[%s442 + $0x24] sm:$0xf] %vm2638, %v2615
        %2649 = vst.msk [vmem:[%s442 + $0x28] sm:$0xf] %vm2638, %v2616
        %2650 = vst.msk [vmem:[%s442 + $0x2c] sm:$0xf] %vm2638, %v2617
        %2651 = vst.msk [vmem:[%s442 + $0x30] sm:$0xf] %vm2638, %v2618
        %2652 = vst.msk [vmem:[%s442 + $0x34] sm:$0xf] %vm2638, %v2619
        %2653 = vst.msk [vmem:[%s442 + $0x38] sm:$0xf] %vm2638, %v2620
        %2654 = vst.msk [vmem:[%s442 + $0x3c] sm:$0xf] %vm2638, %v2621
        %s2655 = sand.u32 %s271, 1
        %s2656 = scalar_lea.sflag [#allocation4], %s2655
        %s2657 = sand.u32 %s271, 1
        %s2658 = smul.addr %s2657, 64
        %s2659 = scalar_lea.vmem [#allocation3], %s2658
        // Predicated region
        $region65: #{bottleneck_forward_nhwc.1} parent=55 // pred_check
          %p2660 = pneg %p281
        $region66: #{bottleneck_forward_nhwc.1} parent=55 // pred_check_branch
          %2662 = sbr.rel (%p2660) target = $region68
        $region67: #{bottleneck_forward_nhwc.1} parent=55 // pred_region
          %s2663 = smul.u32 8, %s28
          %s2665 = ssub.s32 1024, 1024
          %2666 = vsyncadd %s2656, %s2665
          %s2667 = smul.addr %s2663, 2
          %s2668 = smul.addr %s27, 32
          %s2669 = sadd.s32 %s2667, %s2668
          %s2670 = smul.addr %s2669, 64
          %s2671 = scalar_lea.hbm %s9, %s2670
          %s2672 = sshll.u32 %s2659, 4
          %s2673 = int_to_ptr.vmem [resolvable:$true] %s2672
          %2678 = dma.vmem_to_hbm [thread:$0]  %s2673, 1024, %s2671, %s2656, 64, 64, 4
        $region68: #{bottleneck_forward_nhwc.1} parent=55 // pred_fallthru
          _
      $region56: #{bottleneck_forward_nhwc.1} parent=5 // pred_fallthru
        _
      %p2679 = scmp.le.s32.totalorder 2, %s18
      // Predicated region
      $region69: #{bottleneck_forward_nhwc.1} parent=5 // pred_check
        %p2680 = pneg %p2679
      $region70: #{bottleneck_forward_nhwc.1} parent=5 // pred_check_branch
        %2682 = sbr.rel (%p2680) target = $region72
      $region71: #{bottleneck_forward_nhwc.1} parent=5 // pred_region
        %s2683 = ssub.s32 %s18, 2
        // Predicated region
        $region73: #{bottleneck_forward_nhwc.1} parent=71 // pred_check
          %p2684 = pneg %p287
        $region74: #{bottleneck_forward_nhwc.1} parent=71 // pred_check_branch
          %2686 = sbr.rel (%p2684) target = $region76
        $region75: #{bottleneck_forward_nhwc.1} parent=71 // pred_region
          %s2687 = sand.u32 %s272, 1
          %s2688 = scalar_lea.sflag [#allocation4], %s2687
          %s2689 = sand.u32 %s272, 1
          %s2690 = smul.addr %s2689, 64
          %s2691 = scalar_lea.vmem [#allocation3], %s2690
          %2692 = dma.done %s2688, 1024
        $region76: #{bottleneck_forward_nhwc.1} parent=71 // pred_fallthru
          _
      $region72: #{bottleneck_forward_nhwc.1} parent=5 // pred_fallthru
        _
    $region6: #{bottleneck_forward_nhwc.1} parent=1 // loop_footer
      %s22 = sadd.s32 1, %s18
    $region7: #{bottleneck_forward_nhwc.1} parent=1 // loop_footer_branch
      %17 = sbr.rel target = $region3
    $region8: #{bottleneck_forward_nhwc.1} parent=1 // loop_exit
      _
    %2693 = vsyncpa [#allocation4], 1
    %s2694 = scalar_lea.sflag [#allocation4], 1
    %2695 = vsyncpa %s2694, 1

</llo_original>
